<compile_context>
chip_gen: v5e
topology: v5e:2x2
jax: 0.10.0
libtpu: 0.0.40
codegen_flags: <defaults>
</compile_context>

<pallas_src>
import jax
import jax.numpy as jnp
from jax.experimental import pallas as pl
from jax.experimental.pallas import tpu as pltpu

HIDDEN = 256          # hidden width per head
H2 = 2 * HIDDEN       # both heads fused (stacked along the feature axis)


# ----------------------------------------------------------------------------- kernel
def _qnet_kernel(sa_ref,                      # (in_pad, TB) f32   fused [s;a] input, transposed
                 w14_ref, b14_ref,            # layer 1: (H2, in_pad) bf16, (H2, 1) f32
                 w2_ref, w5_ref, b25_ref,     # layer 2: (256,256) bf16 x2, (H2, 1) f32
                 w36_ref, b36_ref,            # layer 3: (2, H2) bf16 block-diag, (2, 1) f32
                 qt_ref):                     # (2, TB) f32 : row 0 = q1, row 1 = q2
    # ---- layer 1 on the MXU (both heads fused), f32 accumulation ----
    sa = sa_ref[...].astype(jnp.bfloat16)                         # (in_pad, TB)
    hg = jnp.dot(w14_ref[...], sa, preferred_element_type=jnp.float32)   # (H2, TB)
    hg = jnp.maximum(hg + b14_ref[...], 0.0)                      # bias + ReLU on VPU
    hg = hg.astype(jnp.bfloat16)

    # ---- layer 2: two (256, 256) x (256, TB) MXU matmuls, f32 accumulation ----
    b25 = b25_ref[...]
    h2 = jnp.maximum(
        jnp.dot(w2_ref[...], hg[:HIDDEN, :], preferred_element_type=jnp.float32)
        + b25[:HIDDEN, :], 0.0)
    g2 = jnp.maximum(
        jnp.dot(w5_ref[...], hg[HIDDEN:, :], preferred_element_type=jnp.float32)
        + b25[HIDDEN:, :], 0.0)

    # ---- layer 3: single fused (2, H2) block-diagonal head -> lane-dense (2, TB) ----
    w36 = w36_ref[...]
    qt = (jnp.dot(w36[:, :HIDDEN], h2.astype(jnp.bfloat16),
                  preferred_element_type=jnp.float32)
          + jnp.dot(w36[:, HIDDEN:], g2.astype(jnp.bfloat16),
                    preferred_element_type=jnp.float32)
          + b36_ref[...])
    qt_ref[...] = qt.astype(qt_ref.dtype)


# ----------------------------------------------------------------------------- wrapper
def _round_up(x, m):
    return ((x + m - 1) // m) * m


def _pick_batch_tile(B):
    # Lane-dim tiles of 128..1024; aim for >= 2 tiles so both v7x TensorCores
    # get work, and grow toward 1024 for big B to amortize per-step overhead.
    half = -(-B // 2)
    return max(128, min(1024, _round_up(half, 128)))


def _legalize_tile(bt):
    return max(128, min(1024, _round_up(int(bt), 128)))


def _build_sa_t(s, a, in_pad):
    """Fused, feature-padded, transposed input: (in_pad, B) f32."""
    B = s.shape[0]
    in_dim = s.shape[1] + a.shape[1]
    pieces = [s, a]
    if in_pad > in_dim:
        pieces.append(jnp.zeros((B, in_pad - in_dim), s.dtype))
    return jnp.concatenate(pieces, axis=1).T


def qnet_forward(s, a, params, *, batch_tile=None):
    """Twin-Q forward: returns (q1, q2), each (B, 1) float32."""
    B = s.shape[0]
    in_pad = params["w14"].shape[1]
    sa_t = _build_sa_t(s, a, in_pad)                 # one-off layout plumbing in XLA

    tb = _pick_batch_tile(B) if batch_tile is None else _legalize_tile(batch_tile)
    grid = (pl.cdiv(B, tb),)

    def act(rows):   # activation blocks march over the batch (lane) axis
        return pl.BlockSpec((rows, tb), lambda i: (0, i))

    def res(r, c):   # weights: same block every step -> stay VMEM-resident
        return pl.BlockSpec((r, c), lambda i: (0, 0))

    qt = pl.pallas_call(
        _qnet_kernel,
        out_shape=jax.ShapeDtypeStruct((2, B), jnp.float32),
        grid=grid,
        in_specs=[
            act(in_pad),             # sa_t
            res(H2, in_pad),         # w14
            res(H2, 1),              # b14
            res(HIDDEN, HIDDEN),     # w2
            res(HIDDEN, HIDDEN),     # w5
            res(H2, 1),              # b25
            res(2, H2),              # w36 (block-diagonal fused output head)
            res(2, 1),               # b36
        ],
        out_specs=act(2),            # lane-dense (2, tb) output blocks
        compiler_params=pltpu.CompilerParams(
            dimension_semantics=("parallel",)),
    )(sa_t, params["w14"], params["b14"], params["w2"], params["w5"],
      params["b25"], params["w36"], params["b36"])

    return qt[0, :][:, None], qt[1, :][:, None]


# ----------------------------------------------------------------------------- params
def init_params(key, state_dim, action_dim, init_w=0.003,
                mxu_weight_dtype=jnp.bfloat16):
    """Mirrors nn.Linear default init (+/- 1/sqrt(fan_in)) and the explicit
    +/- init_w on the output layers.  Weights are stored in PyTorch's
    (out_features, in_features) layout, fused/padded for the kernel."""
    in_dim = state_dim + action_dim
    in_pad = _round_up(in_dim, 8)
    ks = jax.random.split(key, 12)

    def unif(k, shape, bound):
        return jax.random.uniform(k, shape, jnp.float32, -bound, bound)

    b_in = 1.0 / (in_dim ** 0.5)
    b_h = 1.0 / (HIDDEN ** 0.5)

    w1 = unif(ks[0], (HIDDEN, in_dim), b_in); b1 = unif(ks[1], (HIDDEN, 1), b_in)
    w2 = unif(ks[2], (HIDDEN, HIDDEN), b_h);  b2 = unif(ks[3], (HIDDEN, 1), b_h)
    w3 = unif(ks[4], (1, HIDDEN), init_w);    b3 = unif(ks[5], (1, 1), init_w)
    w4 = unif(ks[6], (HIDDEN, in_dim), b_in); b4 = unif(ks[7], (HIDDEN, 1), b_in)
    w5 = unif(ks[8], (HIDDEN, HIDDEN), b_h);  b5 = unif(ks[9], (HIDDEN, 1), b_h)
    w6 = unif(ks[10], (1, HIDDEN), init_w);   b6 = unif(ks[11], (1, 1), init_w)

    pad_cols = jnp.zeros((HIDDEN, in_pad - in_dim), jnp.float32)
    w14 = jnp.concatenate([jnp.concatenate([w1, pad_cols], axis=1),
                           jnp.concatenate([w4, pad_cols], axis=1)], axis=0)
    zeros_h = jnp.zeros((1, HIDDEN), jnp.float32)
    w36 = jnp.concatenate([jnp.concatenate([w3, zeros_h], axis=1),
                           jnp.concatenate([zeros_h, w6], axis=1)], axis=0)

    return dict(
        w14=w14.astype(mxu_weight_dtype),                  # (512, in_pad) bf16
        b14=jnp.concatenate([b1, b4], axis=0),             # (512, 1)      f32
        w2=w2.astype(mxu_weight_dtype),                    # (256, 256)    bf16
        w5=w5.astype(mxu_weight_dtype),                    # (256, 256)    bf16
        b25=jnp.concatenate([b2, b5], axis=0),             # (512, 1)      f32
        w36=w36.astype(mxu_weight_dtype),                  # (2, 512)      bf16 block-diag
        b36=jnp.concatenate([b3, b6], axis=0),             # (2, 1)        f32
    )


# ----------------------------------------------------------------------------- reference
def qnet_reference(s, a, p):
    """Pure-JAX reference, precision-matched to the kernel (same bf16 rounding
    points, f32 accumulation at highest matmul precision)."""
    HI = jax.lax.Precision.HIGHEST
    f32 = jnp.float32
    in_pad = p["w14"].shape[1]
    sa_t = _build_sa_t(s, a, in_pad).astype(jnp.bfloat16).astype(f32)

    hg = jnp.maximum(jnp.dot(p["w14"].astype(f32), sa_t, precision=HI)
                     + p["b14"], 0.0)
    hg = hg.astype(jnp.bfloat16).astype(f32)
    h2 = jnp.maximum(jnp.dot(p["w2"].astype(f32), hg[:HIDDEN], precision=HI)
                     + p["b25"][:HIDDEN], 0.0)
    g2 = jnp.maximum(jnp.dot(p["w5"].astype(f32), hg[HIDDEN:], precision=HI)
                     + p["b25"][HIDDEN:], 0.0)
    h2g2 = jnp.concatenate([h2, g2], axis=0).astype(jnp.bfloat16).astype(f32)
    qt = jnp.dot(p["w36"].astype(f32), h2g2, precision=HI) + p["b36"]
    return qt[0, :][:, None], qt[1, :][:, None]


# ----------------------------------------------------------------------------- demo / check
if __name__ == "__main__":
    # Pendulum-v1: state_dim=3, action_dim=1
    state_dim, action_dim = 3, 1
    batch = 2

    key = jax.random.PRNGKey(0)
    kp, ks, ka = jax.random.split(key, 3)

    params = init_params(kp, state_dim, action_dim)
    s = jax.random.normal(ks, (batch, state_dim), jnp.float32)
    a = jax.random.uniform(ka, (batch, action_dim), jnp.float32, -1.0, 1.0)

    q1, q2 = qnet_forward(s, a, params)
    jax.block_until_ready((q1, q2))

    r1, r2 = qnet_reference(s, a, params)
    assert q1.shape == (batch, 1) and q2.shape == (batch, 1)
    # Reference mirrors the kernel's bf16/f32 precision model, so only
    # accumulation-order differences remain.
    assert jnp.allclose(q1, r1, atol=1e-3, rtol=1e-3), "q1 mismatch vs reference"
    assert jnp.allclose(q2, r2, atol=1e-3, rtol=1e-3), "q2 mismatch vs reference"

    # Exercise the batch grid: 2 tiles with a partial (masked) last tile.
    kbs, kba = jax.random.split(jax.random.PRNGKey(1))
    B2 = 300
    s2 = jax.random.normal(kbs, (B2, state_dim), jnp.float32)
    a2 = jax.random.uniform(kba, (B2, action_dim), jnp.float32, -1.0, 1.0)
    q1b, q2b = qnet_forward(s2, a2, params)
    jax.block_until_ready((q1b, q2b))
    r1b, r2b = qnet_reference(s2, a2, params)
    assert jnp.allclose(q1b, r1b, atol=1e-3, rtol=1e-3), "q1 mismatch (gridded batch)"
    assert jnp.allclose(q2b, r2b, atol=1e-3, rtol=1e-3), "q2 mismatch (gridded batch)"

    print("KERNEL_OK")
</pallas_src>

<mosaic_0001>
module attributes {stable_mosaic.version = 11 : i64} {
  func.func @_qnet_kernel(%arg0: i32, %arg1: memref<8x128xf32, #tpu.memory_space<vmem>>, %arg2: memref<512x8xbf16, #tpu.memory_space<vmem>>, %arg3: memref<512x1xf32, #tpu.memory_space<vmem>>, %arg4: memref<256x256xbf16, #tpu.memory_space<vmem>>, %arg5: memref<256x256xbf16, #tpu.memory_space<vmem>>, %arg6: memref<512x1xf32, #tpu.memory_space<vmem>>, %arg7: memref<2x512xbf16, #tpu.memory_space<vmem>>, %arg8: memref<2x1xf32, #tpu.memory_space<vmem>>, %arg9: memref<2x128xf32, #tpu.memory_space<vmem>>) attributes {dimension_semantics = [#tpu.dimension_semantics<parallel>], iteration_bounds = array<i64: 1>, scalar_prefetch = 0 : i64, scratch_operands = 0 : i64, tpu.core_type = #tpu.core_type<tc>, window_params = [{transform_indices = @transform_0, window_bounds = array<i64: 8, 128>}, {pipeline_mode = #tpu.pipeline_mode<synchronous>, transform_indices = @transform_1, window_bounds = array<i64: 512, 8>}, {pipeline_mode = #tpu.pipeline_mode<synchronous>, transform_indices = @transform_2, window_bounds = array<i64: 512, 1>}, {pipeline_mode = #tpu.pipeline_mode<synchronous>, transform_indices = @transform_3, window_bounds = array<i64: 256, 256>}, {pipeline_mode = #tpu.pipeline_mode<synchronous>, transform_indices = @transform_4, window_bounds = array<i64: 256, 256>}, {pipeline_mode = #tpu.pipeline_mode<synchronous>, transform_indices = @transform_5, window_bounds = array<i64: 512, 1>}, {pipeline_mode = #tpu.pipeline_mode<synchronous>, transform_indices = @transform_6, window_bounds = array<i64: 2, 512>}, {pipeline_mode = #tpu.pipeline_mode<synchronous>, transform_indices = @transform_7, window_bounds = array<i64: 2, 1>}, {transform_indices = @transform_8, window_bounds = array<i64: 2, 128>}]} {
    %c0 = arith.constant 0 : index
    %c0_0 = arith.constant 0 : index
    %0 = vector.load %arg1[%c0, %c0_0] : memref<8x128xf32, #tpu.memory_space<vmem>>, vector<8x128xf32>
    %1 = arith.truncf %0 : vector<8x128xf32> to vector<8x128xbf16>
    %c0_1 = arith.constant 0 : index
    %c0_2 = arith.constant 0 : index
    %2 = vector.load %arg2[%c0_1, %c0_2] : memref<512x8xbf16, #tpu.memory_space<vmem>>, vector<512x8xbf16>
    %cst = arith.constant dense<0.000000e+00> : vector<512x128xf32>
    %3 = tpu.matmul %2, %1, %cst {dimension_numbers = #tpu.dot_dimension_numbers<[1], [0], [0], [1], [0, 0, 1, 1], [], []>} : vector<512x8xbf16>, vector<8x128xbf16>, vector<512x128xf32> -> vector<512x128xf32>
    %c0_3 = arith.constant 0 : index
    %c0_4 = arith.constant 0 : index
    %4 = vector.load %arg3[%c0_3, %c0_4] : memref<512x1xf32, #tpu.memory_space<vmem>>, vector<512x1xf32>
    %5 = vector.broadcast %4 : vector<512x1xf32> to vector<512x128xf32>
    %6 = arith.addf %3, %5 : vector<512x128xf32>
    %cst_5 = arith.constant 0.000000e+00 : f32
    %7 = vector.broadcast %cst_5 : f32 to vector<512x128xf32>
    %8 = arith.maximumf %6, %7 : vector<512x128xf32>
    %9 = arith.truncf %8 : vector<512x128xf32> to vector<512x128xbf16>
    %c0_6 = arith.constant 0 : index
    %c0_7 = arith.constant 0 : index
    %10 = vector.load %arg6[%c0_6, %c0_7] : memref<512x1xf32, #tpu.memory_space<vmem>>, vector<512x1xf32>
    %c0_8 = arith.constant 0 : index
    %c0_9 = arith.constant 0 : index
    %11 = vector.load %arg4[%c0_8, %c0_9] : memref<256x256xbf16, #tpu.memory_space<vmem>>, vector<256x256xbf16>
    %12 = vector.extract_strided_slice %9 {offsets = [0, 0], sizes = [256, 128], strides = [1, 1]} : vector<512x128xbf16> to vector<256x128xbf16>
    %cst_10 = arith.constant dense<0.000000e+00> : vector<256x128xf32>
    %13 = tpu.matmul %11, %12, %cst_10 {dimension_numbers = #tpu.dot_dimension_numbers<[1], [0], [0], [1], [0, 0, 1, 1], [], []>} : vector<256x256xbf16>, vector<256x128xbf16>, vector<256x128xf32> -> vector<256x128xf32>
    %14 = vector.extract_strided_slice %10 {offsets = [0, 0], sizes = [256, 1], strides = [1, 1]} : vector<512x1xf32> to vector<256x1xf32>
    %15 = vector.broadcast %14 : vector<256x1xf32> to vector<256x128xf32>
    %16 = arith.addf %13, %15 : vector<256x128xf32>
    %cst_11 = arith.constant 0.000000e+00 : f32
    %17 = vector.broadcast %cst_11 : f32 to vector<256x128xf32>
    %18 = arith.maximumf %16, %17 : vector<256x128xf32>
    %c0_12 = arith.constant 0 : index
    %c0_13 = arith.constant 0 : index
    %19 = vector.load %arg5[%c0_12, %c0_13] : memref<256x256xbf16, #tpu.memory_space<vmem>>, vector<256x256xbf16>
    %20 = vector.extract_strided_slice %9 {offsets = [256, 0], sizes = [256, 128], strides = [1, 1]} : vector<512x128xbf16> to vector<256x128xbf16>
    %cst_14 = arith.constant dense<0.000000e+00> : vector<256x128xf32>
    %21 = tpu.matmul %19, %20, %cst_14 {dimension_numbers = #tpu.dot_dimension_numbers<[1], [0], [0], [1], [0, 0, 1, 1], [], []>} : vector<256x256xbf16>, vector<256x128xbf16>, vector<256x128xf32> -> vector<256x128xf32>
    %22 = vector.extract_strided_slice %10 {offsets = [256, 0], sizes = [256, 1], strides = [1, 1]} : vector<512x1xf32> to vector<256x1xf32>
    %23 = vector.broadcast %22 : vector<256x1xf32> to vector<256x128xf32>
    %24 = arith.addf %21, %23 : vector<256x128xf32>
    %cst_15 = arith.constant 0.000000e+00 : f32
    %25 = vector.broadcast %cst_15 : f32 to vector<256x128xf32>
    %26 = arith.maximumf %24, %25 : vector<256x128xf32>
    %c0_16 = arith.constant 0 : index
    %c0_17 = arith.constant 0 : index
    %27 = vector.load %arg7[%c0_16, %c0_17] : memref<2x512xbf16, #tpu.memory_space<vmem>>, vector<2x512xbf16>
    %28 = vector.extract_strided_slice %27 {offsets = [0, 0], sizes = [2, 256], strides = [1, 1]} : vector<2x512xbf16> to vector<2x256xbf16>
    %29 = arith.truncf %18 : vector<256x128xf32> to vector<256x128xbf16>
    %cst_18 = arith.constant dense<0.000000e+00> : vector<2x128xf32>
    %30 = tpu.matmul %28, %29, %cst_18 {dimension_numbers = #tpu.dot_dimension_numbers<[1], [0], [0], [1], [0, 0, 1, 1], [], []>} : vector<2x256xbf16>, vector<256x128xbf16>, vector<2x128xf32> -> vector<2x128xf32>
    %31 = vector.extract_strided_slice %27 {offsets = [0, 256], sizes = [2, 256], strides = [1, 1]} : vector<2x512xbf16> to vector<2x256xbf16>
    %32 = arith.truncf %26 : vector<256x128xf32> to vector<256x128xbf16>
    %cst_19 = arith.constant dense<0.000000e+00> : vector<2x128xf32>
    %33 = tpu.matmul %31, %32, %cst_19 {dimension_numbers = #tpu.dot_dimension_numbers<[1], [0], [0], [1], [0, 0, 1, 1], [], []>} : vector<2x256xbf16>, vector<256x128xbf16>, vector<2x128xf32> -> vector<2x128xf32>
    %34 = arith.addf %30, %33 : vector<2x128xf32>
    %c0_20 = arith.constant 0 : index
    %c0_21 = arith.constant 0 : index
    %35 = vector.load %arg8[%c0_20, %c0_21] : memref<2x1xf32, #tpu.memory_space<vmem>>, vector<2x1xf32>
    %36 = vector.broadcast %35 : vector<2x1xf32> to vector<2x128xf32>
    %37 = arith.addf %34, %36 : vector<2x128xf32>
    %c0_22 = arith.constant 0 : index
    %c0_23 = arith.constant 0 : index
    %38 = vector.load %arg9[%c0_22, %c0_23] : memref<2x128xf32, #tpu.memory_space<vmem>>, vector<2x128xf32>
    tpu.vector_store %arg9[%c0_22, %c0_23], %37 {strides = array<i32>} : memref<2x128xf32, #tpu.memory_space<vmem>>, vector<2x128xf32>,
    return
  }
  func.func @transform_0(%arg0: i32) -> (i32, i32) {
    %c0_i32 = arith.constant 0 : i32
    %c0_i32_0 = arith.constant 0 : i32
    return %c0_i32, %arg0 : i32, i32
  }
  func.func @transform_1(%arg0: i32) -> (i32, i32) {
    %c0_i32 = arith.constant 0 : i32
    %c0_i32_0 = arith.constant 0 : i32
    %c0_i32_1 = arith.constant 0 : i32
    return %c0_i32, %c0_i32_0 : i32, i32
  }
  func.func @transform_2(%arg0: i32) -> (i32, i32) {
    %c0_i32 = arith.constant 0 : i32
    %c0_i32_0 = arith.constant 0 : i32
    %c0_i32_1 = arith.constant 0 : i32
    return %c0_i32, %c0_i32_0 : i32, i32
  }
  func.func @transform_3(%arg0: i32) -> (i32, i32) {
    %c0_i32 = arith.constant 0 : i32
    %c0_i32_0 = arith.constant 0 : i32
    %c0_i32_1 = arith.constant 0 : i32
    return %c0_i32, %c0_i32_0 : i32, i32
  }
  func.func @transform_4(%arg0: i32) -> (i32, i32) {
    %c0_i32 = arith.constant 0 : i32
    %c0_i32_0 = arith.constant 0 : i32
    %c0_i32_1 = arith.constant 0 : i32
    return %c0_i32, %c0_i32_0 : i32, i32
  }
  func.func @transform_5(%arg0: i32) -> (i32, i32) {
    %c0_i32 = arith.constant 0 : i32
    %c0_i32_0 = arith.constant 0 : i32
    %c0_i32_1 = arith.constant 0 : i32
    return %c0_i32, %c0_i32_0 : i32, i32
  }
  func.func @transform_6(%arg0: i32) -> (i32, i32) {
    %c0_i32 = arith.constant 0 : i32
    %c0_i32_0 = arith.constant 0 : i32
    %c0_i32_1 = arith.constant 0 : i32
    return %c0_i32, %c0_i32_0 : i32, i32
  }
  func.func @transform_7(%arg0: i32) -> (i32, i32) {
    %c0_i32 = arith.constant 0 : i32
    %c0_i32_0 = arith.constant 0 : i32
    %c0_i32_1 = arith.constant 0 : i32
    return %c0_i32, %c0_i32_0 : i32, i32
  }
  func.func @transform_8(%arg0: i32) -> (i32, i32) {
    %c0_i32 = arith.constant 0 : i32
    %c0_i32_0 = arith.constant 0 : i32
    return %c0_i32, %arg0 : i32, i32
  }
}

</mosaic_0001>

<llo_original>
// kernel: tpu_custom_call.1
$region0: #{tpu_custom_call.1}
  #allocation0 [shape = 'u32[]', space=smem, size = 0x4, offset = 0x4, fixed_abs, tag = 'smem constant byte address 0x4 - core index']
  #allocation1 [shape = 'u32[72,128]{1,0:T(1,128)}', space=vmem, size = 0x9000, scoped, tag = 'internal scratch']
  %s0 = inlined_call_operand.vmem [shape: f32[8,2], index: 0, kind: input, shape index: {}]
  %s1 = inlined_call_operand.vmem [shape: bf16[512,8], index: 1, kind: input, shape index: {}]
  %s2 = inlined_call_operand.vmem [shape: f32[512,1], index: 2, kind: input, shape index: {}]
  %s3 = inlined_call_operand.vmem [shape: bf16[256,256], index: 3, kind: input, shape index: {}]
  %s4 = inlined_call_operand.vmem [shape: bf16[256,256], index: 4, kind: input, shape index: {}]
  %s5 = inlined_call_operand.vmem [shape: f32[512,1], index: 5, kind: input, shape index: {}]
  %s6 = inlined_call_operand.vmem [shape: bf16[2,512], index: 6, kind: input, shape index: {}]
  %s7 = inlined_call_operand.vmem [shape: f32[2,1], index: 7, kind: input, shape index: {}]
  %s8 = inlined_call_operand.hbm [shape: f32[2,2], index: 8, kind: output, shape index: {}]
  %s9 = sld [smem:[#allocation0]]
  $region42: #{tpu_custom_call.1} parent=0
    _
  %s11 = ssub.s32 1, %s9
  %s12 = scalar_select 0, %s11, %s9
  $region1: #{tpu_custom_call.1} parent=0
    #allocation2 [shape = 'u8[1024]{0}', space=vmem, size = 0x400, scoped, tag = 'output window, operand 0, single buffered']
    #allocation3 [shape = 's32[1]{0}', space=sflag, size = 0x4, scoped, tag = 'scoped memory for tpu_custom_call.1']
    %13 = vsyncpa [#allocation3], 0
    // Predicated region
    $region2: #{tpu_custom_call.1} parent=1 // pred_check
      _
    $region3: #{tpu_custom_call.1} parent=1 // pred_check_branch
      %15 = sbr.rel (0) target = $region5
    $region4: #{tpu_custom_call.1} parent=1 // pred_region
      _
    $region5: #{tpu_custom_call.1} parent=1 // pred_fallthru
      _
    // Predicated region
    $region6: #{tpu_custom_call.1} parent=1 // pred_check
      _
    $region7: #{tpu_custom_call.1} parent=1 // pred_check_branch
      %17 = sbr.rel (0) target = $region9
    $region8: #{tpu_custom_call.1} parent=1 // pred_region
      _
    $region9: #{tpu_custom_call.1} parent=1 // pred_fallthru
      _
    // Predicated region
    $region10: #{tpu_custom_call.1} parent=1 // pred_check
      _
    $region11: #{tpu_custom_call.1} parent=1 // pred_check_branch
      %19 = sbr.rel (0) target = $region13
    $region12: #{tpu_custom_call.1} parent=1 // pred_region
      _
    $region13: #{tpu_custom_call.1} parent=1 // pred_fallthru
      _
    // Predicated region
    $region14: #{tpu_custom_call.1} parent=1 // pred_check
      _
    $region15: #{tpu_custom_call.1} parent=1 // pred_check_branch
      %21 = sbr.rel (0) target = $region17
    $region16: #{tpu_custom_call.1} parent=1 // pred_region
      _
    $region17: #{tpu_custom_call.1} parent=1 // pred_fallthru
      _
    // Predicated region
    $region18: #{tpu_custom_call.1} parent=1 // pred_check
      _
    $region19: #{tpu_custom_call.1} parent=1 // pred_check_branch
      %23 = sbr.rel (0) target = $region21
    $region20: #{tpu_custom_call.1} parent=1 // pred_region
      _
    $region21: #{tpu_custom_call.1} parent=1 // pred_fallthru
      _
    // Predicated region
    $region22: #{tpu_custom_call.1} parent=1 // pred_check
      _
    $region23: #{tpu_custom_call.1} parent=1 // pred_check_branch
      %25 = sbr.rel (0) target = $region25
    $region24: #{tpu_custom_call.1} parent=1 // pred_region
      _
    $region25: #{tpu_custom_call.1} parent=1 // pred_fallthru
      _
    // Predicated region
    $region26: #{tpu_custom_call.1} parent=1 // pred_check
      _
    $region27: #{tpu_custom_call.1} parent=1 // pred_check_branch
      %27 = sbr.rel (0) target = $region29
    $region28: #{tpu_custom_call.1} parent=1 // pred_region
      _
    $region29: #{tpu_custom_call.1} parent=1 // pred_fallthru
      _
    // Predicated region
    $region30: #{tpu_custom_call.1} parent=1 // pred_check
      _
    $region31: #{tpu_custom_call.1} parent=1 // pred_check_branch
      %29 = sbr.rel (0) target = $region33
    $region32: #{tpu_custom_call.1} parent=1 // pred_region
      _
    $region33: #{tpu_custom_call.1} parent=1 // pred_fallthru
      _
    %v31 = vld [vmem:[%s0] sm:$0xff]
    %v32 = vpack.c.bf16 %v31, %v31
    %v33 = vld [vmem:[%s1] sm:$0xf]
    %v34 = vld [vmem:[%s1 + $0x4] sm:$0xf]
    %v35 = vld [vmem:[%s1 + $0x8] sm:$0xf]
    %v36 = vld [vmem:[%s1 + $0xc] sm:$0xf]
    %v37 = vld [vmem:[%s1 + $0x10] sm:$0xf]
    %v38 = vld [vmem:[%s1 + $0x14] sm:$0xf]
    %v39 = vld [vmem:[%s1 + $0x18] sm:$0xf]
    %v40 = vld [vmem:[%s1 + $0x1c] sm:$0xf]
    %v41 = vld [vmem:[%s1 + $0x20] sm:$0xf]
    %v42 = vld [vmem:[%s1 + $0x24] sm:$0xf]
    %v43 = vld [vmem:[%s1 + $0x28] sm:$0xf]
    %v44 = vld [vmem:[%s1 + $0x2c] sm:$0xf]
    %v45 = vld [vmem:[%s1 + $0x30] sm:$0xf]
    %v46 = vld [vmem:[%s1 + $0x34] sm:$0xf]
    %v47 = vld [vmem:[%s1 + $0x38] sm:$0xf]
    %v48 = vld [vmem:[%s1 + $0x3c] sm:$0xf]
    %v49 = vld [vmem:[%s1 + $0x40] sm:$0xf]
    %v50 = vld [vmem:[%s1 + $0x44] sm:$0xf]
    %v51 = vld [vmem:[%s1 + $0x48] sm:$0xf]
    %v52 = vld [vmem:[%s1 + $0x4c] sm:$0xf]
    %v53 = vld [vmem:[%s1 + $0x50] sm:$0xf]
    %v54 = vld [vmem:[%s1 + $0x54] sm:$0xf]
    %v55 = vld [vmem:[%s1 + $0x58] sm:$0xf]
    %v56 = vld [vmem:[%s1 + $0x5c] sm:$0xf]
    %v57 = vld [vmem:[%s1 + $0x60] sm:$0xf]
    %v58 = vld [vmem:[%s1 + $0x64] sm:$0xf]
    %v59 = vld [vmem:[%s1 + $0x68] sm:$0xf]
    %v60 = vld [vmem:[%s1 + $0x6c] sm:$0xf]
    %v61 = vld [vmem:[%s1 + $0x70] sm:$0xf]
    %v62 = vld [vmem:[%s1 + $0x74] sm:$0xf]
    %v63 = vld [vmem:[%s1 + $0x78] sm:$0xf]
    %v64 = vld [vmem:[%s1 + $0x7c] sm:$0xf]
    %v65 = vld [vmem:[%s1 + $0x80] sm:$0xf]
    %v66 = vld [vmem:[%s1 + $0x84] sm:$0xf]
    %v67 = vld [vmem:[%s1 + $0x88] sm:$0xf]
    %v68 = vld [vmem:[%s1 + $0x8c] sm:$0xf]
    %v69 = vld [vmem:[%s1 + $0x90] sm:$0xf]
    %v70 = vld [vmem:[%s1 + $0x94] sm:$0xf]
    %v71 = vld [vmem:[%s1 + $0x98] sm:$0xf]
    %v72 = vld [vmem:[%s1 + $0x9c] sm:$0xf]
    %v73 = vld [vmem:[%s1 + $0xa0] sm:$0xf]
    %v74 = vld [vmem:[%s1 + $0xa4] sm:$0xf]
    %v75 = vld [vmem:[%s1 + $0xa8] sm:$0xf]
    %v76 = vld [vmem:[%s1 + $0xac] sm:$0xf]
    %v77 = vld [vmem:[%s1 + $0xb0] sm:$0xf]
    %v78 = vld [vmem:[%s1 + $0xb4] sm:$0xf]
    %v79 = vld [vmem:[%s1 + $0xb8] sm:$0xf]
    %v80 = vld [vmem:[%s1 + $0xbc] sm:$0xf]
    %v81 = vld [vmem:[%s1 + $0xc0] sm:$0xf]
    %v82 = vld [vmem:[%s1 + $0xc4] sm:$0xf]
    %v83 = vld [vmem:[%s1 + $0xc8] sm:$0xf]
    %v84 = vld [vmem:[%s1 + $0xcc] sm:$0xf]
    %v85 = vld [vmem:[%s1 + $0xd0] sm:$0xf]
    %v86 = vld [vmem:[%s1 + $0xd4] sm:$0xf]
    %v87 = vld [vmem:[%s1 + $0xd8] sm:$0xf]
    %v88 = vld [vmem:[%s1 + $0xdc] sm:$0xf]
    %v89 = vld [vmem:[%s1 + $0xe0] sm:$0xf]
    %v90 = vld [vmem:[%s1 + $0xe4] sm:$0xf]
    %v91 = vld [vmem:[%s1 + $0xe8] sm:$0xf]
    %v92 = vld [vmem:[%s1 + $0xec] sm:$0xf]
    %v93 = vld [vmem:[%s1 + $0xf0] sm:$0xf]
    %v94 = vld [vmem:[%s1 + $0xf4] sm:$0xf]
    %v95 = vld [vmem:[%s1 + $0xf8] sm:$0xf]
    %v96 = vld [vmem:[%s1 + $0xfc] sm:$0xf]
    %v97 = vld [vmem:[%s2] sm:$0xff]
    %v98 = vld [vmem:[%s2 + $0x8] sm:$0xff]
    %v99 = vld [vmem:[%s2 + $0x10] sm:$0xff]
    %v100 = vld [vmem:[%s2 + $0x18] sm:$0xff]
    %v101 = vld [vmem:[%s2 + $0x20] sm:$0xff]
    %v102 = vld [vmem:[%s2 + $0x28] sm:$0xff]
    %v103 = vld [vmem:[%s2 + $0x30] sm:$0xff]
    %v104 = vld [vmem:[%s2 + $0x38] sm:$0xff]
    %v105 = vld [vmem:[%s2 + $0x40] sm:$0xff]
    %v106 = vld [vmem:[%s2 + $0x48] sm:$0xff]
    %v107 = vld [vmem:[%s2 + $0x50] sm:$0xff]
    %v108 = vld [vmem:[%s2 + $0x58] sm:$0xff]
    %v109 = vld [vmem:[%s2 + $0x60] sm:$0xff]
    %v110 = vld [vmem:[%s2 + $0x68] sm:$0xff]
    %v111 = vld [vmem:[%s2 + $0x70] sm:$0xff]
    %v112 = vld [vmem:[%s2 + $0x78] sm:$0xff]
    %v113 = vld [vmem:[%s2 + $0x80] sm:$0xff]
    %v114 = vld [vmem:[%s2 + $0x88] sm:$0xff]
    %v115 = vld [vmem:[%s2 + $0x90] sm:$0xff]
    %v116 = vld [vmem:[%s2 + $0x98] sm:$0xff]
    %v117 = vld [vmem:[%s2 + $0xa0] sm:$0xff]
    %v118 = vld [vmem:[%s2 + $0xa8] sm:$0xff]
    %v119 = vld [vmem:[%s2 + $0xb0] sm:$0xff]
    %v120 = vld [vmem:[%s2 + $0xb8] sm:$0xff]
    %v121 = vld [vmem:[%s2 + $0xc0] sm:$0xff]
    %v122 = vld [vmem:[%s2 + $0xc8] sm:$0xff]
    %v123 = vld [vmem:[%s2 + $0xd0] sm:$0xff]
    %v124 = vld [vmem:[%s2 + $0xd8] sm:$0xff]
    %v125 = vld [vmem:[%s2 + $0xe0] sm:$0xff]
    %v126 = vld [vmem:[%s2 + $0xe8] sm:$0xff]
    %v127 = vld [vmem:[%s2 + $0xf0] sm:$0xff]
    %v128 = vld [vmem:[%s2 + $0xf8] sm:$0xff]
    %v129 = vld [vmem:[%s2 + $0x100] sm:$0xff]
    %v130 = vld [vmem:[%s2 + $0x108] sm:$0xff]
    %v131 = vld [vmem:[%s2 + $0x110] sm:$0xff]
    %v132 = vld [vmem:[%s2 + $0x118] sm:$0xff]
    %v133 = vld [vmem:[%s2 + $0x120] sm:$0xff]
    %v134 = vld [vmem:[%s2 + $0x128] sm:$0xff]
    %v135 = vld [vmem:[%s2 + $0x130] sm:$0xff]
    %v136 = vld [vmem:[%s2 + $0x138] sm:$0xff]
    %v137 = vld [vmem:[%s2 + $0x140] sm:$0xff]
    %v138 = vld [vmem:[%s2 + $0x148] sm:$0xff]
    %v139 = vld [vmem:[%s2 + $0x150] sm:$0xff]
    %v140 = vld [vmem:[%s2 + $0x158] sm:$0xff]
    %v141 = vld [vmem:[%s2 + $0x160] sm:$0xff]
    %v142 = vld [vmem:[%s2 + $0x168] sm:$0xff]
    %v143 = vld [vmem:[%s2 + $0x170] sm:$0xff]
    %v144 = vld [vmem:[%s2 + $0x178] sm:$0xff]
    %v145 = vld [vmem:[%s2 + $0x180] sm:$0xff]
    %v146 = vld [vmem:[%s2 + $0x188] sm:$0xff]
    %v147 = vld [vmem:[%s2 + $0x190] sm:$0xff]
    %v148 = vld [vmem:[%s2 + $0x198] sm:$0xff]
    %v149 = vld [vmem:[%s2 + $0x1a0] sm:$0xff]
    %v150 = vld [vmem:[%s2 + $0x1a8] sm:$0xff]
    %v151 = vld [vmem:[%s2 + $0x1b0] sm:$0xff]
    %v152 = vld [vmem:[%s2 + $0x1b8] sm:$0xff]
    %v153 = vld [vmem:[%s2 + $0x1c0] sm:$0xff]
    %v154 = vld [vmem:[%s2 + $0x1c8] sm:$0xff]
    %v155 = vld [vmem:[%s2 + $0x1d0] sm:$0xff]
    %v156 = vld [vmem:[%s2 + $0x1d8] sm:$0xff]
    %v157 = vld [vmem:[%s2 + $0x1e0] sm:$0xff]
    %v158 = vld [vmem:[%s2 + $0x1e8] sm:$0xff]
    %v159 = vld [vmem:[%s2 + $0x1f0] sm:$0xff]
    %v160 = vld [vmem:[%s2 + $0x1f8] sm:$0xff]
    %162 = vset.pattern.permute.xlu0 0
    %163 = vperm.xlu0 %162, %v97
    %v164 = vpop.permute.xlu0 %163
    %167 = vset.pattern.permute.xlu0 0
    %168 = vperm.xlu0 %167, %v98
    %v169 = vpop.permute.xlu0 %168
    %172 = vset.pattern.permute.xlu0 0
    %173 = vperm.xlu0 %172, %v99
    %v174 = vpop.permute.xlu0 %173
    %177 = vset.pattern.permute.xlu0 0
    %178 = vperm.xlu0 %177, %v100
    %v179 = vpop.permute.xlu0 %178
    %182 = vset.pattern.permute.xlu0 0
    %183 = vperm.xlu0 %182, %v101
    %v184 = vpop.permute.xlu0 %183
    %187 = vset.pattern.permute.xlu0 0
    %188 = vperm.xlu0 %187, %v102
    %v189 = vpop.permute.xlu0 %188
    %192 = vset.pattern.permute.xlu0 0
    %193 = vperm.xlu0 %192, %v103
    %v194 = vpop.permute.xlu0 %193
    %197 = vset.pattern.permute.xlu0 0
    %198 = vperm.xlu0 %197, %v104
    %v199 = vpop.permute.xlu0 %198
    %202 = vset.pattern.permute.xlu0 0
    %203 = vperm.xlu0 %202, %v105
    %v204 = vpop.permute.xlu0 %203
    %207 = vset.pattern.permute.xlu0 0
    %208 = vperm.xlu0 %207, %v106
    %v209 = vpop.permute.xlu0 %208
    %212 = vset.pattern.permute.xlu0 0
    %213 = vperm.xlu0 %212, %v107
    %v214 = vpop.permute.xlu0 %213
    %217 = vset.pattern.permute.xlu0 0
    %218 = vperm.xlu0 %217, %v108
    %v219 = vpop.permute.xlu0 %218
    %222 = vset.pattern.permute.xlu0 0
    %223 = vperm.xlu0 %222, %v109
    %v224 = vpop.permute.xlu0 %223
    %227 = vset.pattern.permute.xlu0 0
    %228 = vperm.xlu0 %227, %v110
    %v229 = vpop.permute.xlu0 %228
    %232 = vset.pattern.permute.xlu0 0
    %233 = vperm.xlu0 %232, %v111
    %v234 = vpop.permute.xlu0 %233
    %237 = vset.pattern.permute.xlu0 0
    %238 = vperm.xlu0 %237, %v112
    %v239 = vpop.permute.xlu0 %238
    %242 = vset.pattern.permute.xlu0 0
    %243 = vperm.xlu0 %242, %v113
    %v244 = vpop.permute.xlu0 %243
    %247 = vset.pattern.permute.xlu0 0
    %248 = vperm.xlu0 %247, %v114
    %v249 = vpop.permute.xlu0 %248
    %252 = vset.pattern.permute.xlu0 0
    %253 = vperm.xlu0 %252, %v115
    %v254 = vpop.permute.xlu0 %253
    %257 = vset.pattern.permute.xlu0 0
    %258 = vperm.xlu0 %257, %v116
    %v259 = vpop.permute.xlu0 %258
    %262 = vset.pattern.permute.xlu0 0
    %263 = vperm.xlu0 %262, %v117
    %v264 = vpop.permute.xlu0 %263
    %267 = vset.pattern.permute.xlu0 0
    %268 = vperm.xlu0 %267, %v118
    %v269 = vpop.permute.xlu0 %268
    %272 = vset.pattern.permute.xlu0 0
    %273 = vperm.xlu0 %272, %v119
    %v274 = vpop.permute.xlu0 %273
    %277 = vset.pattern.permute.xlu0 0
    %278 = vperm.xlu0 %277, %v120
    %v279 = vpop.permute.xlu0 %278
    %282 = vset.pattern.permute.xlu0 0
    %283 = vperm.xlu0 %282, %v121
    %v284 = vpop.permute.xlu0 %283
    %287 = vset.pattern.permute.xlu0 0
    %288 = vperm.xlu0 %287, %v122
    %v289 = vpop.permute.xlu0 %288
    %292 = vset.pattern.permute.xlu0 0
    %293 = vperm.xlu0 %292, %v123
    %v294 = vpop.permute.xlu0 %293
    %297 = vset.pattern.permute.xlu0 0
    %298 = vperm.xlu0 %297, %v124
    %v299 = vpop.permute.xlu0 %298
    %302 = vset.pattern.permute.xlu0 0
    %303 = vperm.xlu0 %302, %v125
    %v304 = vpop.permute.xlu0 %303
    %307 = vset.pattern.permute.xlu0 0
    %308 = vperm.xlu0 %307, %v126
    %v309 = vpop.permute.xlu0 %308
    %312 = vset.pattern.permute.xlu0 0
    %313 = vperm.xlu0 %312, %v127
    %v314 = vpop.permute.xlu0 %313
    %317 = vset.pattern.permute.xlu0 0
    %318 = vperm.xlu0 %317, %v128
    %v319 = vpop.permute.xlu0 %318
    %322 = vset.pattern.permute.xlu0 0
    %323 = vperm.xlu0 %322, %v129
    %v324 = vpop.permute.xlu0 %323
    %327 = vset.pattern.permute.xlu0 0
    %328 = vperm.xlu0 %327, %v130
    %v329 = vpop.permute.xlu0 %328
    %332 = vset.pattern.permute.xlu0 0
    %333 = vperm.xlu0 %332, %v131
    %v334 = vpop.permute.xlu0 %333
    %337 = vset.pattern.permute.xlu0 0
    %338 = vperm.xlu0 %337, %v132
    %v339 = vpop.permute.xlu0 %338
    %342 = vset.pattern.permute.xlu0 0
    %343 = vperm.xlu0 %342, %v133
    %v344 = vpop.permute.xlu0 %343
    %347 = vset.pattern.permute.xlu0 0
    %348 = vperm.xlu0 %347, %v134
    %v349 = vpop.permute.xlu0 %348
    %352 = vset.pattern.permute.xlu0 0
    %353 = vperm.xlu0 %352, %v135
    %v354 = vpop.permute.xlu0 %353
    %357 = vset.pattern.permute.xlu0 0
    %358 = vperm.xlu0 %357, %v136
    %v359 = vpop.permute.xlu0 %358
    %362 = vset.pattern.permute.xlu0 0
    %363 = vperm.xlu0 %362, %v137
    %v364 = vpop.permute.xlu0 %363
    %367 = vset.pattern.permute.xlu0 0
    %368 = vperm.xlu0 %367, %v138
    %v369 = vpop.permute.xlu0 %368
    %372 = vset.pattern.permute.xlu0 0
    %373 = vperm.xlu0 %372, %v139
    %v374 = vpop.permute.xlu0 %373
    %377 = vset.pattern.permute.xlu0 0
    %378 = vperm.xlu0 %377, %v140
    %v379 = vpop.permute.xlu0 %378
    %382 = vset.pattern.permute.xlu0 0
    %383 = vperm.xlu0 %382, %v141
    %v384 = vpop.permute.xlu0 %383
    %387 = vset.pattern.permute.xlu0 0
    %388 = vperm.xlu0 %387, %v142
    %v389 = vpop.permute.xlu0 %388
    %392 = vset.pattern.permute.xlu0 0
    %393 = vperm.xlu0 %392, %v143
    %v394 = vpop.permute.xlu0 %393
    %397 = vset.pattern.permute.xlu0 0
    %398 = vperm.xlu0 %397, %v144
    %v399 = vpop.permute.xlu0 %398
    %402 = vset.pattern.permute.xlu0 0
    %403 = vperm.xlu0 %402, %v145
    %v404 = vpop.permute.xlu0 %403
    %407 = vset.pattern.permute.xlu0 0
    %408 = vperm.xlu0 %407, %v146
    %v409 = vpop.permute.xlu0 %408
    %412 = vset.pattern.permute.xlu0 0
    %413 = vperm.xlu0 %412, %v147
    %v414 = vpop.permute.xlu0 %413
    %417 = vset.pattern.permute.xlu0 0
    %418 = vperm.xlu0 %417, %v148
    %v419 = vpop.permute.xlu0 %418
    %422 = vset.pattern.permute.xlu0 0
    %423 = vperm.xlu0 %422, %v149
    %v424 = vpop.permute.xlu0 %423
    %427 = vset.pattern.permute.xlu0 0
    %428 = vperm.xlu0 %427, %v150
    %v429 = vpop.permute.xlu0 %428
    %432 = vset.pattern.permute.xlu0 0
    %433 = vperm.xlu0 %432, %v151
    %v434 = vpop.permute.xlu0 %433
    %437 = vset.pattern.permute.xlu0 0
    %438 = vperm.xlu0 %437, %v152
    %v439 = vpop.permute.xlu0 %438
    %442 = vset.pattern.permute.xlu0 0
    %443 = vperm.xlu0 %442, %v153
    %v444 = vpop.permute.xlu0 %443
    %447 = vset.pattern.permute.xlu0 0
    %448 = vperm.xlu0 %447, %v154
    %v449 = vpop.permute.xlu0 %448
    %452 = vset.pattern.permute.xlu0 0
    %453 = vperm.xlu0 %452, %v155
    %v454 = vpop.permute.xlu0 %453
    %457 = vset.pattern.permute.xlu0 0
    %458 = vperm.xlu0 %457, %v156
    %v459 = vpop.permute.xlu0 %458
    %462 = vset.pattern.permute.xlu0 0
    %463 = vperm.xlu0 %462, %v157
    %v464 = vpop.permute.xlu0 %463
    %467 = vset.pattern.permute.xlu0 0
    %468 = vperm.xlu0 %467, %v158
    %v469 = vpop.permute.xlu0 %468
    %472 = vset.pattern.permute.xlu0 0
    %473 = vperm.xlu0 %472, %v159
    %v474 = vpop.permute.xlu0 %473
    %477 = vset.pattern.permute.xlu0 0
    %478 = vperm.xlu0 %477, %v160
    %v479 = vpop.permute.xlu0 %478
    %v545 = vunpack.c.l.b16 %v33
    %v546 = vunpack.c.l.b16 %v34
    %v547 = vunpack.c.l.b16 %v35
    %v548 = vunpack.c.l.b16 %v36
    %v549 = vunpack.c.l.b16 %v37
    %v550 = vunpack.c.l.b16 %v38
    %v551 = vunpack.c.l.b16 %v39
    %v552 = vunpack.c.l.b16 %v40
    %v553 = vunpack.c.l.b16 %v41
    %v554 = vunpack.c.l.b16 %v42
    %v555 = vunpack.c.l.b16 %v43
    %v556 = vunpack.c.l.b16 %v44
    %v557 = vunpack.c.l.b16 %v45
    %v558 = vunpack.c.l.b16 %v46
    %v559 = vunpack.c.l.b16 %v47
    %v560 = vunpack.c.l.b16 %v48
    %v561 = vunpack.c.l.b16 %v49
    %v562 = vunpack.c.l.b16 %v50
    %v563 = vunpack.c.l.b16 %v51
    %v564 = vunpack.c.l.b16 %v52
    %v565 = vunpack.c.l.b16 %v53
    %v566 = vunpack.c.l.b16 %v54
    %v567 = vunpack.c.l.b16 %v55
    %v568 = vunpack.c.l.b16 %v56
    %v569 = vunpack.c.l.b16 %v57
    %v570 = vunpack.c.l.b16 %v58
    %v571 = vunpack.c.l.b16 %v59
    %v572 = vunpack.c.l.b16 %v60
    %v573 = vunpack.c.l.b16 %v61
    %v574 = vunpack.c.l.b16 %v62
    %v575 = vunpack.c.l.b16 %v63
    %v576 = vunpack.c.l.b16 %v64
    %v577 = vunpack.c.l.b16 %v65
    %v578 = vunpack.c.l.b16 %v66
    %v579 = vunpack.c.l.b16 %v67
    %v580 = vunpack.c.l.b16 %v68
    %v581 = vunpack.c.l.b16 %v69
    %v582 = vunpack.c.l.b16 %v70
    %v583 = vunpack.c.l.b16 %v71
    %v584 = vunpack.c.l.b16 %v72
    %v585 = vunpack.c.l.b16 %v73
    %v586 = vunpack.c.l.b16 %v74
    %v587 = vunpack.c.l.b16 %v75
    %v588 = vunpack.c.l.b16 %v76
    %v589 = vunpack.c.l.b16 %v77
    %v590 = vunpack.c.l.b16 %v78
    %v591 = vunpack.c.l.b16 %v79
    %v592 = vunpack.c.l.b16 %v80
    %v593 = vunpack.c.l.b16 %v81
    %v594 = vunpack.c.l.b16 %v82
    %v595 = vunpack.c.l.b16 %v83
    %v596 = vunpack.c.l.b16 %v84
    %v597 = vunpack.c.l.b16 %v85
    %v598 = vunpack.c.l.b16 %v86
    %v599 = vunpack.c.l.b16 %v87
    %v600 = vunpack.c.l.b16 %v88
    %v601 = vunpack.c.l.b16 %v89
    %v602 = vunpack.c.l.b16 %v90
    %v603 = vunpack.c.l.b16 %v91
    %v604 = vunpack.c.l.b16 %v92
    %v605 = vunpack.c.l.b16 %v93
    %v606 = vunpack.c.l.b16 %v94
    %v607 = vunpack.c.l.b16 %v95
    %v608 = vunpack.c.l.b16 %v96
    %v609 = vpack.c.b16 %v546, %v545
    %v610 = vpack.c.b16 %v548, %v547
    %v611 = vpack.c.b16 %v550, %v549
    %v612 = vpack.c.b16 %v552, %v551
    %v613 = vpack.c.b16 %v554, %v553
    %v614 = vpack.c.b16 %v556, %v555
    %v615 = vpack.c.b16 %v558, %v557
    %v616 = vpack.c.b16 %v560, %v559
    %v617 = vpack.c.b16 %v562, %v561
    %v618 = vpack.c.b16 %v564, %v563
    %v619 = vpack.c.b16 %v566, %v565
    %v620 = vpack.c.b16 %v568, %v567
    %v621 = vpack.c.b16 %v570, %v569
    %v622 = vpack.c.b16 %v572, %v571
    %v623 = vpack.c.b16 %v574, %v573
    %v624 = vpack.c.b16 %v576, %v575
    %v625 = vpack.c.b16 %v578, %v577
    %v626 = vpack.c.b16 %v580, %v579
    %v627 = vpack.c.b16 %v582, %v581
    %v628 = vpack.c.b16 %v584, %v583
    %v629 = vpack.c.b16 %v586, %v585
    %v630 = vpack.c.b16 %v588, %v587
    %v631 = vpack.c.b16 %v590, %v589
    %v632 = vpack.c.b16 %v592, %v591
    %v633 = vpack.c.b16 %v594, %v593
    %v634 = vpack.c.b16 %v596, %v595
    %v635 = vpack.c.b16 %v598, %v597
    %v636 = vpack.c.b16 %v600, %v599
    %v637 = vpack.c.b16 %v602, %v601
    %v638 = vpack.c.b16 %v604, %v603
    %v639 = vpack.c.b16 %v606, %v605
    %v640 = vpack.c.b16 %v608, %v607
    %vm641 = vcmask 64512
    %v643 = vsel %vm641, %v609, 0
    %v646 = vsel %vm641, %v610, 0
    %v649 = vsel %vm641, %v611, 0
    %v652 = vsel %vm641, %v612, 0
    %v655 = vsel %vm641, %v613, 0
    %v658 = vsel %vm641, %v614, 0
    %v661 = vsel %vm641, %v615, 0
    %v664 = vsel %vm641, %v616, 0
    %v667 = vsel %vm641, %v617, 0
    %v670 = vsel %vm641, %v618, 0
    %v673 = vsel %vm641, %v619, 0
    %v676 = vsel %vm641, %v620, 0
    %v679 = vsel %vm641, %v621, 0
    %v682 = vsel %vm641, %v622, 0
    %v685 = vsel %vm641, %v623, 0
    %v688 = vsel %vm641, %v624, 0
    %v691 = vsel %vm641, %v625, 0
    %v694 = vsel %vm641, %v626, 0
    %v697 = vsel %vm641, %v627, 0
    %v700 = vsel %vm641, %v628, 0
    %v703 = vsel %vm641, %v629, 0
    %v706 = vsel %vm641, %v630, 0
    %v709 = vsel %vm641, %v631, 0
    %v712 = vsel %vm641, %v632, 0
    %v715 = vsel %vm641, %v633, 0
    %v718 = vsel %vm641, %v634, 0
    %v721 = vsel %vm641, %v635, 0
    %v724 = vsel %vm641, %v636, 0
    %v727 = vsel %vm641, %v637, 0
    %v730 = vsel %vm641, %v638, 0
    %v733 = vsel %vm641, %v639, 0
    %v736 = vsel %vm641, %v640, 0
    %vm738 = vcmask 1043456
    %v740 = vsel %vm738, %v32, 0
    %742 = vmatpush.bf16.msra.mxu0 0
    %743 = vmatpush.bf16.msra.mxu0 0
    %744 = vmatpush.bf16.msra.mxu0 0
    %745 = vmatpush.bf16.msra.mxu0 0
    %746 = vmatpush.bf16.msra.mxu0 0
    %747 = vmatpush.bf16.msra.mxu0 0
    %748 = vmatpush.bf16.msra.mxu0 0
    %749 = vmatpush.bf16.msra.mxu0 %v740
    %750 = vmatmul.bf16.gmra.mxu0 %v643
    %v751 = vpop.f32.mrf.mxu0
    %v752 = vadd.f32 %v164, %v751
    %v753 = vpop.f32.mrf.mxu0
    %v754 = vadd.f32 %v169, %v753
    %755 = vmatmul.bf16.gmra.mxu0 %v646
    %v756 = vpop.f32.mrf.mxu0
    %v757 = vadd.f32 %v174, %v756
    %v758 = vpop.f32.mrf.mxu0
    %v759 = vadd.f32 %v179, %v758
    %760 = vmatmul.bf16.gmra.mxu0 %v649
    %v761 = vpop.f32.mrf.mxu0
    %v762 = vadd.f32 %v184, %v761
    %v763 = vpop.f32.mrf.mxu0
    %v764 = vadd.f32 %v189, %v763
    %765 = vmatmul.bf16.gmra.mxu0 %v652
    %v766 = vpop.f32.mrf.mxu0
    %v767 = vadd.f32 %v194, %v766
    %v768 = vpop.f32.mrf.mxu0
    %v769 = vadd.f32 %v199, %v768
    %770 = vmatmul.bf16.gmra.mxu0 %v655
    %v771 = vpop.f32.mrf.mxu0
    %v772 = vadd.f32 %v204, %v771
    %v773 = vpop.f32.mrf.mxu0
    %v774 = vadd.f32 %v209, %v773
    %775 = vmatmul.bf16.gmra.mxu0 %v658
    %v776 = vpop.f32.mrf.mxu0
    %v777 = vadd.f32 %v214, %v776
    %v778 = vpop.f32.mrf.mxu0
    %v779 = vadd.f32 %v219, %v778
    %780 = vmatmul.bf16.gmra.mxu0 %v661
    %v781 = vpop.f32.mrf.mxu0
    %v782 = vadd.f32 %v224, %v781
    %v783 = vpop.f32.mrf.mxu0
    %v784 = vadd.f32 %v229, %v783
    %785 = vmatmul.bf16.gmra.mxu0 %v664
    %v786 = vpop.f32.mrf.mxu0
    %v787 = vadd.f32 %v234, %v786
    %v788 = vpop.f32.mrf.mxu0
    %v789 = vadd.f32 %v239, %v788
    %790 = vmatmul.bf16.gmra.mxu0 %v667
    %v791 = vpop.f32.mrf.mxu0
    %v792 = vadd.f32 %v244, %v791
    %v793 = vpop.f32.mrf.mxu0
    %v794 = vadd.f32 %v249, %v793
    %795 = vmatmul.bf16.gmra.mxu0 %v670
    %v796 = vpop.f32.mrf.mxu0
    %v797 = vadd.f32 %v254, %v796
    %v798 = vpop.f32.mrf.mxu0
    %v799 = vadd.f32 %v259, %v798
    %800 = vmatmul.bf16.gmra.mxu0 %v673
    %v801 = vpop.f32.mrf.mxu0
    %v802 = vadd.f32 %v264, %v801
    %v803 = vpop.f32.mrf.mxu0
    %v804 = vadd.f32 %v269, %v803
    %805 = vmatmul.bf16.gmra.mxu0 %v676
    %v806 = vpop.f32.mrf.mxu0
    %v807 = vadd.f32 %v274, %v806
    %v808 = vpop.f32.mrf.mxu0
    %v809 = vadd.f32 %v279, %v808
    %810 = vmatmul.bf16.gmra.mxu0 %v679
    %v811 = vpop.f32.mrf.mxu0
    %v812 = vadd.f32 %v284, %v811
    %v813 = vpop.f32.mrf.mxu0
    %v814 = vadd.f32 %v289, %v813
    %815 = vmatmul.bf16.gmra.mxu0 %v682
    %v816 = vpop.f32.mrf.mxu0
    %v817 = vadd.f32 %v294, %v816
    %v818 = vpop.f32.mrf.mxu0
    %v819 = vadd.f32 %v299, %v818
    %820 = vmatmul.bf16.gmra.mxu0 %v685
    %v821 = vpop.f32.mrf.mxu0
    %v822 = vadd.f32 %v304, %v821
    %v823 = vpop.f32.mrf.mxu0
    %v824 = vadd.f32 %v309, %v823
    %825 = vmatmul.bf16.gmra.mxu0 %v688
    %v826 = vpop.f32.mrf.mxu0
    %v827 = vadd.f32 %v314, %v826
    %v828 = vpop.f32.mrf.mxu0
    %v829 = vadd.f32 %v319, %v828
    %830 = vmatmul.bf16.gmra.mxu0 %v691
    %v831 = vpop.f32.mrf.mxu0
    %v832 = vadd.f32 %v324, %v831
    %v833 = vpop.f32.mrf.mxu0
    %v834 = vadd.f32 %v329, %v833
    %835 = vmatmul.bf16.gmra.mxu0 %v694
    %v836 = vpop.f32.mrf.mxu0
    %v837 = vadd.f32 %v334, %v836
    %v838 = vpop.f32.mrf.mxu0
    %v839 = vadd.f32 %v339, %v838
    %840 = vmatmul.bf16.gmra.mxu0 %v697
    %v841 = vpop.f32.mrf.mxu0
    %v842 = vadd.f32 %v344, %v841
    %v843 = vpop.f32.mrf.mxu0
    %v844 = vadd.f32 %v349, %v843
    %845 = vmatmul.bf16.gmra.mxu0 %v700
    %v846 = vpop.f32.mrf.mxu0
    %v847 = vadd.f32 %v354, %v846
    %v848 = vpop.f32.mrf.mxu0
    %v849 = vadd.f32 %v359, %v848
    %850 = vmatmul.bf16.gmra.mxu0 %v703
    %v851 = vpop.f32.mrf.mxu0
    %v852 = vadd.f32 %v364, %v851
    %v853 = vpop.f32.mrf.mxu0
    %v854 = vadd.f32 %v369, %v853
    %855 = vmatmul.bf16.gmra.mxu0 %v706
    %v856 = vpop.f32.mrf.mxu0
    %v857 = vadd.f32 %v374, %v856
    %v858 = vpop.f32.mrf.mxu0
    %v859 = vadd.f32 %v379, %v858
    %860 = vmatmul.bf16.gmra.mxu0 %v709
    %v861 = vpop.f32.mrf.mxu0
    %v862 = vadd.f32 %v384, %v861
    %v863 = vpop.f32.mrf.mxu0
    %v864 = vadd.f32 %v389, %v863
    %865 = vmatmul.bf16.gmra.mxu0 %v712
    %v866 = vpop.f32.mrf.mxu0
    %v867 = vadd.f32 %v394, %v866
    %v868 = vpop.f32.mrf.mxu0
    %v869 = vadd.f32 %v399, %v868
    %870 = vmatmul.bf16.gmra.mxu0 %v715
    %v871 = vpop.f32.mrf.mxu0
    %v872 = vadd.f32 %v404, %v871
    %v873 = vpop.f32.mrf.mxu0
    %v874 = vadd.f32 %v409, %v873
    %875 = vmatmul.bf16.gmra.mxu0 %v718
    %v876 = vpop.f32.mrf.mxu0
    %v877 = vadd.f32 %v414, %v876
    %v878 = vpop.f32.mrf.mxu0
    %v879 = vadd.f32 %v419, %v878
    %880 = vmatmul.bf16.gmra.mxu0 %v721
    %v881 = vpop.f32.mrf.mxu0
    %v882 = vadd.f32 %v424, %v881
    %v883 = vpop.f32.mrf.mxu0
    %v884 = vadd.f32 %v429, %v883
    %885 = vmatmul.bf16.gmra.mxu0 %v724
    %v886 = vpop.f32.mrf.mxu0
    %v887 = vadd.f32 %v434, %v886
    %v888 = vpop.f32.mrf.mxu0
    %v889 = vadd.f32 %v439, %v888
    %890 = vmatmul.bf16.gmra.mxu0 %v727
    %v891 = vpop.f32.mrf.mxu0
    %v892 = vadd.f32 %v444, %v891
    %v893 = vpop.f32.mrf.mxu0
    %v894 = vadd.f32 %v449, %v893
    %895 = vmatmul.bf16.gmra.mxu0 %v730
    %v896 = vpop.f32.mrf.mxu0
    %v897 = vadd.f32 %v454, %v896
    %v898 = vpop.f32.mrf.mxu0
    %v899 = vadd.f32 %v459, %v898
    %900 = vmatmul.bf16.gmra.mxu0 %v733
    %v901 = vpop.f32.mrf.mxu0
    %v902 = vadd.f32 %v464, %v901
    %v903 = vpop.f32.mrf.mxu0
    %v904 = vadd.f32 %v469, %v903
    %905 = vmatmul.bf16.gmra.mxu0 %v736
    %v906 = vpop.f32.mrf.mxu0
    %v907 = vadd.f32 %v474, %v906
    %v908 = vpop.f32.mrf.mxu0
    %v909 = vadd.f32 %v479, %v908
    %910 = vdwg.mxu0
    %v911 = vmax.f32 %v752, 0.0
    %v912 = vmax.f32 %v754, 0.0
    %v913 = vmax.f32 %v757, 0.0
    %v914 = vmax.f32 %v759, 0.0
    %v915 = vmax.f32 %v762, 0.0
    %v916 = vmax.f32 %v764, 0.0
    %v917 = vmax.f32 %v767, 0.0
    %v918 = vmax.f32 %v769, 0.0
    %v919 = vmax.f32 %v772, 0.0
    %v920 = vmax.f32 %v774, 0.0
    %v921 = vmax.f32 %v777, 0.0
    %v922 = vmax.f32 %v779, 0.0
    %v923 = vmax.f32 %v782, 0.0
    %v924 = vmax.f32 %v784, 0.0
    %v925 = vmax.f32 %v787, 0.0
    %v926 = vmax.f32 %v789, 0.0
    %v927 = vmax.f32 %v792, 0.0
    %v928 = vmax.f32 %v794, 0.0
    %v929 = vmax.f32 %v797, 0.0
    %v930 = vmax.f32 %v799, 0.0
    %v931 = vmax.f32 %v802, 0.0
    %v932 = vmax.f32 %v804, 0.0
    %v933 = vmax.f32 %v807, 0.0
    %v934 = vmax.f32 %v809, 0.0
    %v935 = vmax.f32 %v812, 0.0
    %v936 = vmax.f32 %v814, 0.0
    %v937 = vmax.f32 %v817, 0.0
    %v938 = vmax.f32 %v819, 0.0
    %v939 = vmax.f32 %v822, 0.0
    %v940 = vmax.f32 %v824, 0.0
    %v941 = vmax.f32 %v827, 0.0
    %v942 = vmax.f32 %v829, 0.0
    %v943 = vmax.f32 %v832, 0.0
    %v944 = vmax.f32 %v834, 0.0
    %v945 = vmax.f32 %v837, 0.0
    %v946 = vmax.f32 %v839, 0.0
    %v947 = vmax.f32 %v842, 0.0
    %v948 = vmax.f32 %v844, 0.0
    %v949 = vmax.f32 %v847, 0.0
    %v950 = vmax.f32 %v849, 0.0
    %v951 = vmax.f32 %v852, 0.0
    %v952 = vmax.f32 %v854, 0.0
    %v953 = vmax.f32 %v857, 0.0
    %v954 = vmax.f32 %v859, 0.0
    %v955 = vmax.f32 %v862, 0.0
    %v956 = vmax.f32 %v864, 0.0
    %v957 = vmax.f32 %v867, 0.0
    %v958 = vmax.f32 %v869, 0.0
    %v959 = vmax.f32 %v872, 0.0
    %v960 = vmax.f32 %v874, 0.0
    %v961 = vmax.f32 %v877, 0.0
    %v962 = vmax.f32 %v879, 0.0
    %v963 = vmax.f32 %v882, 0.0
    %v964 = vmax.f32 %v884, 0.0
    %v965 = vmax.f32 %v887, 0.0
    %v966 = vmax.f32 %v889, 0.0
    %v967 = vmax.f32 %v892, 0.0
    %v968 = vmax.f32 %v894, 0.0
    %v969 = vmax.f32 %v897, 0.0
    %v970 = vmax.f32 %v899, 0.0
    %v971 = vmax.f32 %v902, 0.0
    %v972 = vmax.f32 %v904, 0.0
    %v973 = vmax.f32 %v907, 0.0
    %v974 = vmax.f32 %v909, 0.0
    %v975 = vpack.c.bf16 %v911, %v911
    %v976 = vpack.c.bf16 %v912, %v912
    %v977 = vpack.c.bf16 %v913, %v913
    %v978 = vpack.c.bf16 %v914, %v914
    %v979 = vpack.c.bf16 %v915, %v915
    %v980 = vpack.c.bf16 %v916, %v916
    %v981 = vpack.c.bf16 %v917, %v917
    %v982 = vpack.c.bf16 %v918, %v918
    %v983 = vpack.c.bf16 %v919, %v919
    %v984 = vpack.c.bf16 %v920, %v920
    %v985 = vpack.c.bf16 %v921, %v921
    %v986 = vpack.c.bf16 %v922, %v922
    %v987 = vpack.c.bf16 %v923, %v923
    %v988 = vpack.c.bf16 %v924, %v924
    %v989 = vpack.c.bf16 %v925, %v925
    %v990 = vpack.c.bf16 %v926, %v926
    %v991 = vpack.c.bf16 %v927, %v927
    %v992 = vpack.c.bf16 %v928, %v928
    %v993 = vpack.c.bf16 %v929, %v929
    %v994 = vpack.c.bf16 %v930, %v930
    %v995 = vpack.c.bf16 %v931, %v931
    %v996 = vpack.c.bf16 %v932, %v932
    %v997 = vpack.c.bf16 %v933, %v933
    %v998 = vpack.c.bf16 %v934, %v934
    %v999 = vpack.c.bf16 %v935, %v935
    %v1000 = vpack.c.bf16 %v936, %v936
    %v1001 = vpack.c.bf16 %v937, %v937
    %v1002 = vpack.c.bf16 %v938, %v938
    %v1003 = vpack.c.bf16 %v939, %v939
    %v1004 = vpack.c.bf16 %v940, %v940
    %v1005 = vpack.c.bf16 %v941, %v941
    %v1006 = vpack.c.bf16 %v942, %v942
    %v1007 = vpack.c.bf16 %v943, %v943
    %v1008 = vpack.c.bf16 %v944, %v944
    %v1009 = vpack.c.bf16 %v945, %v945
    %v1010 = vpack.c.bf16 %v946, %v946
    %v1011 = vpack.c.bf16 %v947, %v947
    %v1012 = vpack.c.bf16 %v948, %v948
    %v1013 = vpack.c.bf16 %v949, %v949
    %v1014 = vpack.c.bf16 %v950, %v950
    %v1015 = vpack.c.bf16 %v951, %v951
    %v1016 = vpack.c.bf16 %v952, %v952
    %v1017 = vpack.c.bf16 %v953, %v953
    %v1018 = vpack.c.bf16 %v954, %v954
    %v1019 = vpack.c.bf16 %v955, %v955
    %v1020 = vpack.c.bf16 %v956, %v956
    %v1021 = vpack.c.bf16 %v957, %v957
    %v1022 = vpack.c.bf16 %v958, %v958
    %v1023 = vpack.c.bf16 %v959, %v959
    %v1024 = vpack.c.bf16 %v960, %v960
    %v1025 = vpack.c.bf16 %v961, %v961
    %v1026 = vpack.c.bf16 %v962, %v962
    %v1027 = vpack.c.bf16 %v963, %v963
    %v1028 = vpack.c.bf16 %v964, %v964
    %v1029 = vpack.c.bf16 %v965, %v965
    %v1030 = vpack.c.bf16 %v966, %v966
    %v1031 = vpack.c.bf16 %v967, %v967
    %v1032 = vpack.c.bf16 %v968, %v968
    %v1033 = vpack.c.bf16 %v969, %v969
    %v1034 = vpack.c.bf16 %v970, %v970
    %v1035 = vpack.c.bf16 %v971, %v971
    %v1036 = vpack.c.bf16 %v972, %v972
    %v1037 = vpack.c.bf16 %v973, %v973
    %v1038 = vpack.c.bf16 %v974, %v974
    %v1039 = vld [vmem:[%s5] sm:$0xff]
    %v1040 = vld [vmem:[%s5 + $0x8] sm:$0xff]
    %v1041 = vld [vmem:[%s5 + $0x10] sm:$0xff]
    %v1042 = vld [vmem:[%s5 + $0x18] sm:$0xff]
    %v1043 = vld [vmem:[%s5 + $0x20] sm:$0xff]
    %v1044 = vld [vmem:[%s5 + $0x28] sm:$0xff]
    %v1045 = vld [vmem:[%s5 + $0x30] sm:$0xff]
    %v1046 = vld [vmem:[%s5 + $0x38] sm:$0xff]
    %v1047 = vld [vmem:[%s5 + $0x40] sm:$0xff]
    %v1048 = vld [vmem:[%s5 + $0x48] sm:$0xff]
    %v1049 = vld [vmem:[%s5 + $0x50] sm:$0xff]
    %v1050 = vld [vmem:[%s5 + $0x58] sm:$0xff]
    %v1051 = vld [vmem:[%s5 + $0x60] sm:$0xff]
    %v1052 = vld [vmem:[%s5 + $0x68] sm:$0xff]
    %v1053 = vld [vmem:[%s5 + $0x70] sm:$0xff]
    %v1054 = vld [vmem:[%s5 + $0x78] sm:$0xff]
    %v1055 = vld [vmem:[%s5 + $0x80] sm:$0xff]
    %v1056 = vld [vmem:[%s5 + $0x88] sm:$0xff]
    %v1057 = vld [vmem:[%s5 + $0x90] sm:$0xff]
    %v1058 = vld [vmem:[%s5 + $0x98] sm:$0xff]
    %v1059 = vld [vmem:[%s5 + $0xa0] sm:$0xff]
    %v1060 = vld [vmem:[%s5 + $0xa8] sm:$0xff]
    %v1061 = vld [vmem:[%s5 + $0xb0] sm:$0xff]
    %v1062 = vld [vmem:[%s5 + $0xb8] sm:$0xff]
    %v1063 = vld [vmem:[%s5 + $0xc0] sm:$0xff]
    %v1064 = vld [vmem:[%s5 + $0xc8] sm:$0xff]
    %v1065 = vld [vmem:[%s5 + $0xd0] sm:$0xff]
    %v1066 = vld [vmem:[%s5 + $0xd8] sm:$0xff]
    %v1067 = vld [vmem:[%s5 + $0xe0] sm:$0xff]
    %v1068 = vld [vmem:[%s5 + $0xe8] sm:$0xff]
    %v1069 = vld [vmem:[%s5 + $0xf0] sm:$0xff]
    %v1070 = vld [vmem:[%s5 + $0xf8] sm:$0xff]
    %v1071 = vld [vmem:[%s5 + $0x100] sm:$0xff]
    %v1072 = vld [vmem:[%s5 + $0x108] sm:$0xff]
    %v1073 = vld [vmem:[%s5 + $0x110] sm:$0xff]
    %v1074 = vld [vmem:[%s5 + $0x118] sm:$0xff]
    %v1075 = vld [vmem:[%s5 + $0x120] sm:$0xff]
    %v1076 = vld [vmem:[%s5 + $0x128] sm:$0xff]
    %v1077 = vld [vmem:[%s5 + $0x130] sm:$0xff]
    %v1078 = vld [vmem:[%s5 + $0x138] sm:$0xff]
    %v1079 = vld [vmem:[%s5 + $0x140] sm:$0xff]
    %v1080 = vld [vmem:[%s5 + $0x148] sm:$0xff]
    %v1081 = vld [vmem:[%s5 + $0x150] sm:$0xff]
    %v1082 = vld [vmem:[%s5 + $0x158] sm:$0xff]
    %v1083 = vld [vmem:[%s5 + $0x160] sm:$0xff]
    %v1084 = vld [vmem:[%s5 + $0x168] sm:$0xff]
    %v1085 = vld [vmem:[%s5 + $0x170] sm:$0xff]
    %v1086 = vld [vmem:[%s5 + $0x178] sm:$0xff]
    %v1087 = vld [vmem:[%s5 + $0x180] sm:$0xff]
    %v1088 = vld [vmem:[%s5 + $0x188] sm:$0xff]
    %v1089 = vld [vmem:[%s5 + $0x190] sm:$0xff]
    %v1090 = vld [vmem:[%s5 + $0x198] sm:$0xff]
    %v1091 = vld [vmem:[%s5 + $0x1a0] sm:$0xff]
    %v1092 = vld [vmem:[%s5 + $0x1a8] sm:$0xff]
    %v1093 = vld [vmem:[%s5 + $0x1b0] sm:$0xff]
    %v1094 = vld [vmem:[%s5 + $0x1b8] sm:$0xff]
    %v1095 = vld [vmem:[%s5 + $0x1c0] sm:$0xff]
    %v1096 = vld [vmem:[%s5 + $0x1c8] sm:$0xff]
    %v1097 = vld [vmem:[%s5 + $0x1d0] sm:$0xff]
    %v1098 = vld [vmem:[%s5 + $0x1d8] sm:$0xff]
    %v1099 = vld [vmem:[%s5 + $0x1e0] sm:$0xff]
    %v1100 = vld [vmem:[%s5 + $0x1e8] sm:$0xff]
    %v1101 = vld [vmem:[%s5 + $0x1f0] sm:$0xff]
    %v1102 = vld [vmem:[%s5 + $0x1f8] sm:$0xff]
    %v1103 = vld [vmem:[%s3] sm:$0xff]
    %v1104 = vld [vmem:[%s3 + $0x8] sm:$0xff]
    %v1105 = vld [vmem:[%s3 + $0x10] sm:$0xff]
    %v1106 = vld [vmem:[%s3 + $0x18] sm:$0xff]
    %v1107 = vld [vmem:[%s3 + $0x20] sm:$0xff]
    %v1108 = vld [vmem:[%s3 + $0x28] sm:$0xff]
    %v1109 = vld [vmem:[%s3 + $0x30] sm:$0xff]
    %v1110 = vld [vmem:[%s3 + $0x38] sm:$0xff]
    %v1111 = vld [vmem:[%s3 + $0x40] sm:$0xff]
    %v1112 = vld [vmem:[%s3 + $0x48] sm:$0xff]
    %v1113 = vld [vmem:[%s3 + $0x50] sm:$0xff]
    %v1114 = vld [vmem:[%s3 + $0x58] sm:$0xff]
    %v1115 = vld [vmem:[%s3 + $0x60] sm:$0xff]
    %v1116 = vld [vmem:[%s3 + $0x68] sm:$0xff]
    %v1117 = vld [vmem:[%s3 + $0x70] sm:$0xff]
    %v1118 = vld [vmem:[%s3 + $0x78] sm:$0xff]
    %v1119 = vld [vmem:[%s3 + $0x80] sm:$0xff]
    %v1120 = vld [vmem:[%s3 + $0x88] sm:$0xff]
    %v1121 = vld [vmem:[%s3 + $0x90] sm:$0xff]
    %v1122 = vld [vmem:[%s3 + $0x98] sm:$0xff]
    %v1123 = vld [vmem:[%s3 + $0xa0] sm:$0xff]
    %v1124 = vld [vmem:[%s3 + $0xa8] sm:$0xff]
    %v1125 = vld [vmem:[%s3 + $0xb0] sm:$0xff]
    %v1126 = vld [vmem:[%s3 + $0xb8] sm:$0xff]
    %v1127 = vld [vmem:[%s3 + $0xc0] sm:$0xff]
    %v1128 = vld [vmem:[%s3 + $0xc8] sm:$0xff]
    %v1129 = vld [vmem:[%s3 + $0xd0] sm:$0xff]
    %v1130 = vld [vmem:[%s3 + $0xd8] sm:$0xff]
    %v1131 = vld [vmem:[%s3 + $0xe0] sm:$0xff]
    %v1132 = vld [vmem:[%s3 + $0xe8] sm:$0xff]
    %v1133 = vld [vmem:[%s3 + $0xf0] sm:$0xff]
    %v1134 = vld [vmem:[%s3 + $0xf8] sm:$0xff]
    %1136 = vset.pattern.permute.xlu0 0
    %1137 = vperm.xlu0 %1136, %v1039
    %v1138 = vpop.permute.xlu0 %1137
    %1141 = vset.pattern.permute.xlu0 0
    %1142 = vperm.xlu0 %1141, %v1040
    %v1143 = vpop.permute.xlu0 %1142
    %1146 = vset.pattern.permute.xlu0 0
    %1147 = vperm.xlu0 %1146, %v1041
    %v1148 = vpop.permute.xlu0 %1147
    %1151 = vset.pattern.permute.xlu0 0
    %1152 = vperm.xlu0 %1151, %v1042
    %v1153 = vpop.permute.xlu0 %1152
    %1156 = vset.pattern.permute.xlu0 0
    %1157 = vperm.xlu0 %1156, %v1043
    %v1158 = vpop.permute.xlu0 %1157
    %1161 = vset.pattern.permute.xlu0 0
    %1162 = vperm.xlu0 %1161, %v1044
    %v1163 = vpop.permute.xlu0 %1162
    %1166 = vset.pattern.permute.xlu0 0
    %1167 = vperm.xlu0 %1166, %v1045
    %v1168 = vpop.permute.xlu0 %1167
    %1171 = vset.pattern.permute.xlu0 0
    %1172 = vperm.xlu0 %1171, %v1046
    %v1173 = vpop.permute.xlu0 %1172
    %1176 = vset.pattern.permute.xlu0 0
    %1177 = vperm.xlu0 %1176, %v1047
    %v1178 = vpop.permute.xlu0 %1177
    %1181 = vset.pattern.permute.xlu0 0
    %1182 = vperm.xlu0 %1181, %v1048
    %v1183 = vpop.permute.xlu0 %1182
    %1186 = vset.pattern.permute.xlu0 0
    %1187 = vperm.xlu0 %1186, %v1049
    %v1188 = vpop.permute.xlu0 %1187
    %1191 = vset.pattern.permute.xlu0 0
    %1192 = vperm.xlu0 %1191, %v1050
    %v1193 = vpop.permute.xlu0 %1192
    %1196 = vset.pattern.permute.xlu0 0
    %1197 = vperm.xlu0 %1196, %v1051
    %v1198 = vpop.permute.xlu0 %1197
    %1201 = vset.pattern.permute.xlu0 0
    %1202 = vperm.xlu0 %1201, %v1052
    %v1203 = vpop.permute.xlu0 %1202
    %1206 = vset.pattern.permute.xlu0 0
    %1207 = vperm.xlu0 %1206, %v1053
    %v1208 = vpop.permute.xlu0 %1207
    %1211 = vset.pattern.permute.xlu0 0
    %1212 = vperm.xlu0 %1211, %v1054
    %v1213 = vpop.permute.xlu0 %1212
    %1216 = vset.pattern.permute.xlu0 0
    %1217 = vperm.xlu0 %1216, %v1055
    %v1218 = vpop.permute.xlu0 %1217
    %1221 = vset.pattern.permute.xlu0 0
    %1222 = vperm.xlu0 %1221, %v1056
    %v1223 = vpop.permute.xlu0 %1222
    %1226 = vset.pattern.permute.xlu0 0
    %1227 = vperm.xlu0 %1226, %v1057
    %v1228 = vpop.permute.xlu0 %1227
    %1231 = vset.pattern.permute.xlu0 0
    %1232 = vperm.xlu0 %1231, %v1058
    %v1233 = vpop.permute.xlu0 %1232
    %1236 = vset.pattern.permute.xlu0 0
    %1237 = vperm.xlu0 %1236, %v1059
    %v1238 = vpop.permute.xlu0 %1237
    %1241 = vset.pattern.permute.xlu0 0
    %1242 = vperm.xlu0 %1241, %v1060
    %v1243 = vpop.permute.xlu0 %1242
    %1246 = vset.pattern.permute.xlu0 0
    %1247 = vperm.xlu0 %1246, %v1061
    %v1248 = vpop.permute.xlu0 %1247
    %1251 = vset.pattern.permute.xlu0 0
    %1252 = vperm.xlu0 %1251, %v1062
    %v1253 = vpop.permute.xlu0 %1252
    %1256 = vset.pattern.permute.xlu0 0
    %1257 = vperm.xlu0 %1256, %v1063
    %v1258 = vpop.permute.xlu0 %1257
    %1261 = vset.pattern.permute.xlu0 0
    %1262 = vperm.xlu0 %1261, %v1064
    %v1263 = vpop.permute.xlu0 %1262
    %1266 = vset.pattern.permute.xlu0 0
    %1267 = vperm.xlu0 %1266, %v1065
    %v1268 = vpop.permute.xlu0 %1267
    %1271 = vset.pattern.permute.xlu0 0
    %1272 = vperm.xlu0 %1271, %v1066
    %v1273 = vpop.permute.xlu0 %1272
    %1276 = vset.pattern.permute.xlu0 0
    %1277 = vperm.xlu0 %1276, %v1067
    %v1278 = vpop.permute.xlu0 %1277
    %1281 = vset.pattern.permute.xlu0 0
    %1282 = vperm.xlu0 %1281, %v1068
    %v1283 = vpop.permute.xlu0 %1282
    %1286 = vset.pattern.permute.xlu0 0
    %1287 = vperm.xlu0 %1286, %v1069
    %v1288 = vpop.permute.xlu0 %1287
    %1291 = vset.pattern.permute.xlu0 0
    %1292 = vperm.xlu0 %1291, %v1070
    %v1293 = vpop.permute.xlu0 %1292
    %v1327 = vunpack.c.l.b16 %v1103
    %v1328 = vunpack.c.h.b16 %v1103
    %v1329 = vunpack.c.l.b16 %v1104
    %v1330 = vunpack.c.h.b16 %v1104
    %v1331 = vunpack.c.l.b16 %v1105
    %v1332 = vunpack.c.h.b16 %v1105
    %v1333 = vunpack.c.l.b16 %v1106
    %v1334 = vunpack.c.h.b16 %v1106
    %v1335 = vunpack.c.l.b16 %v1107
    %v1336 = vunpack.c.h.b16 %v1107
    %v1337 = vunpack.c.l.b16 %v1108
    %v1338 = vunpack.c.h.b16 %v1108
    %v1339 = vunpack.c.l.b16 %v1109
    %v1340 = vunpack.c.h.b16 %v1109
    %v1341 = vunpack.c.l.b16 %v1110
    %v1342 = vunpack.c.h.b16 %v1110
    %v1343 = vunpack.c.l.b16 %v1111
    %v1344 = vunpack.c.h.b16 %v1111
    %v1345 = vunpack.c.l.b16 %v1112
    %v1346 = vunpack.c.h.b16 %v1112
    %v1347 = vunpack.c.l.b16 %v1113
    %v1348 = vunpack.c.h.b16 %v1113
    %v1349 = vunpack.c.l.b16 %v1114
    %v1350 = vunpack.c.h.b16 %v1114
    %v1351 = vunpack.c.l.b16 %v1115
    %v1352 = vunpack.c.h.b16 %v1115
    %v1353 = vunpack.c.l.b16 %v1116
    %v1354 = vunpack.c.h.b16 %v1116
    %v1355 = vunpack.c.l.b16 %v1117
    %v1356 = vunpack.c.h.b16 %v1117
    %v1357 = vunpack.c.l.b16 %v1118
    %v1358 = vunpack.c.h.b16 %v1118
    %v1359 = vunpack.c.l.b16 %v1119
    %v1360 = vunpack.c.h.b16 %v1119
    %v1361 = vunpack.c.l.b16 %v1120
    %v1362 = vunpack.c.h.b16 %v1120
    %v1363 = vunpack.c.l.b16 %v1121
    %v1364 = vunpack.c.h.b16 %v1121
    %v1365 = vunpack.c.l.b16 %v1122
    %v1366 = vunpack.c.h.b16 %v1122
    %v1367 = vunpack.c.l.b16 %v1123
    %v1368 = vunpack.c.h.b16 %v1123
    %v1369 = vunpack.c.l.b16 %v1124
    %v1370 = vunpack.c.h.b16 %v1124
    %v1371 = vunpack.c.l.b16 %v1125
    %v1372 = vunpack.c.h.b16 %v1125
    %v1373 = vunpack.c.l.b16 %v1126
    %v1374 = vunpack.c.h.b16 %v1126
    %v1375 = vunpack.c.l.b16 %v1127
    %v1376 = vunpack.c.h.b16 %v1127
    %v1377 = vunpack.c.l.b16 %v1128
    %v1378 = vunpack.c.h.b16 %v1128
    %v1379 = vunpack.c.l.b16 %v1129
    %v1380 = vunpack.c.h.b16 %v1129
    %v1381 = vunpack.c.l.b16 %v1130
    %v1382 = vunpack.c.h.b16 %v1130
    %v1383 = vunpack.c.l.b16 %v1131
    %v1384 = vunpack.c.h.b16 %v1131
    %v1385 = vunpack.c.l.b16 %v1132
    %v1386 = vunpack.c.h.b16 %v1132
    %v1387 = vunpack.c.l.b16 %v1133
    %v1388 = vunpack.c.h.b16 %v1133
    %v1389 = vunpack.c.l.b16 %v1134
    %v1390 = vunpack.c.h.b16 %v1134
    %v1391 = vpack.c.b16 %v1329, %v1327
    %v1392 = vpack.c.b16 %v1330, %v1328
    %v1393 = vpack.c.b16 %v1333, %v1331
    %v1394 = vpack.c.b16 %v1334, %v1332
    %v1395 = vpack.c.b16 %v1337, %v1335
    %v1396 = vpack.c.b16 %v1338, %v1336
    %v1397 = vpack.c.b16 %v1341, %v1339
    %v1398 = vpack.c.b16 %v1342, %v1340
    %v1399 = vpack.c.b16 %v1345, %v1343
    %v1400 = vpack.c.b16 %v1346, %v1344
    %v1401 = vpack.c.b16 %v1349, %v1347
    %v1402 = vpack.c.b16 %v1350, %v1348
    %v1403 = vpack.c.b16 %v1353, %v1351
    %v1404 = vpack.c.b16 %v1354, %v1352
    %v1405 = vpack.c.b16 %v1357, %v1355
    %v1406 = vpack.c.b16 %v1358, %v1356
    %v1407 = vpack.c.b16 %v1361, %v1359
    %v1408 = vpack.c.b16 %v1362, %v1360
    %v1409 = vpack.c.b16 %v1365, %v1363
    %v1410 = vpack.c.b16 %v1366, %v1364
    %v1411 = vpack.c.b16 %v1369, %v1367
    %v1412 = vpack.c.b16 %v1370, %v1368
    %v1413 = vpack.c.b16 %v1373, %v1371
    %v1414 = vpack.c.b16 %v1374, %v1372
    %v1415 = vpack.c.b16 %v1377, %v1375
    %v1416 = vpack.c.b16 %v1378, %v1376
    %v1417 = vpack.c.b16 %v1381, %v1379
    %v1418 = vpack.c.b16 %v1382, %v1380
    %v1419 = vpack.c.b16 %v1385, %v1383
    %v1420 = vpack.c.b16 %v1386, %v1384
    %v1421 = vpack.c.b16 %v1389, %v1387
    %v1422 = vpack.c.b16 %v1390, %v1388
    %v1487 = vunpack.c.l.b16 %v975
    %v1488 = vunpack.c.l.b16 %v976
    %v1489 = vunpack.c.l.b16 %v977
    %v1490 = vunpack.c.l.b16 %v978
    %v1491 = vunpack.c.l.b16 %v979
    %v1492 = vunpack.c.l.b16 %v980
    %v1493 = vunpack.c.l.b16 %v981
    %v1494 = vunpack.c.l.b16 %v982
    %v1495 = vunpack.c.l.b16 %v983
    %v1496 = vunpack.c.l.b16 %v984
    %v1497 = vunpack.c.l.b16 %v985
    %v1498 = vunpack.c.l.b16 %v986
    %v1499 = vunpack.c.l.b16 %v987
    %v1500 = vunpack.c.l.b16 %v988
    %v1501 = vunpack.c.l.b16 %v989
    %v1502 = vunpack.c.l.b16 %v990
    %v1503 = vunpack.c.l.b16 %v991
    %v1504 = vunpack.c.l.b16 %v992
    %v1505 = vunpack.c.l.b16 %v993
    %v1506 = vunpack.c.l.b16 %v994
    %v1507 = vunpack.c.l.b16 %v995
    %v1508 = vunpack.c.l.b16 %v996
    %v1509 = vunpack.c.l.b16 %v997
    %v1510 = vunpack.c.l.b16 %v998
    %v1511 = vunpack.c.l.b16 %v999
    %v1512 = vunpack.c.l.b16 %v1000
    %v1513 = vunpack.c.l.b16 %v1001
    %v1514 = vunpack.c.l.b16 %v1002
    %v1515 = vunpack.c.l.b16 %v1003
    %v1516 = vunpack.c.l.b16 %v1004
    %v1517 = vunpack.c.l.b16 %v1005
    %v1518 = vunpack.c.l.b16 %v1006
    %v1519 = vpack.c.b16 %v1488, %v1487
    %v1520 = vpack.c.b16 %v1490, %v1489
    %v1521 = vpack.c.b16 %v1492, %v1491
    %v1522 = vpack.c.b16 %v1494, %v1493
    %v1523 = vpack.c.b16 %v1496, %v1495
    %v1524 = vpack.c.b16 %v1498, %v1497
    %v1525 = vpack.c.b16 %v1500, %v1499
    %v1526 = vpack.c.b16 %v1502, %v1501
    %v1527 = vpack.c.b16 %v1504, %v1503
    %v1528 = vpack.c.b16 %v1506, %v1505
    %v1529 = vpack.c.b16 %v1508, %v1507
    %v1530 = vpack.c.b16 %v1510, %v1509
    %v1531 = vpack.c.b16 %v1512, %v1511
    %v1532 = vpack.c.b16 %v1514, %v1513
    %v1533 = vpack.c.b16 %v1516, %v1515
    %v1534 = vpack.c.b16 %v1518, %v1517
    %1551 = vmatpush.bf16.msra.mxu0 %v1526
    %1552 = vmatpush.bf16.msra.mxu0 %v1525
    %1553 = vmatpush.bf16.msra.mxu0 %v1524
    %1554 = vmatpush.bf16.msra.mxu0 %v1523
    %1555 = vmatpush.bf16.msra.mxu0 %v1522
    %1556 = vmatpush.bf16.msra.mxu0 %v1521
    %1557 = vmatpush.bf16.msra.mxu0 %v1520
    %1558 = vmatpush.bf16.msra.mxu0 %v1519
    %1559 = vmatmul.bf16.gmra.mxu0 %v1391
    %v1560 = vpop.f32.mrf.mxu0
    %v1561 = vadd.f32 %v1138, %v1560
    %v1562 = vpop.f32.mrf.mxu0
    %v1563 = vadd.f32 %v1143, %v1562
    %1564 = vmatmul.bf16.gmra.mxu0 %v1393
    %v1565 = vpop.f32.mrf.mxu0
    %v1566 = vadd.f32 %v1148, %v1565
    %v1567 = vpop.f32.mrf.mxu0
    %v1568 = vadd.f32 %v1153, %v1567
    %1569 = vmatmul.bf16.gmra.mxu0 %v1395
    %v1570 = vpop.f32.mrf.mxu0
    %v1571 = vadd.f32 %v1158, %v1570
    %v1572 = vpop.f32.mrf.mxu0
    %v1573 = vadd.f32 %v1163, %v1572
    %1574 = vmatmul.bf16.gmra.mxu0 %v1397
    %v1575 = vpop.f32.mrf.mxu0
    %v1576 = vadd.f32 %v1168, %v1575
    %v1577 = vpop.f32.mrf.mxu0
    %v1578 = vadd.f32 %v1173, %v1577
    %1579 = vmatmul.bf16.gmra.mxu0 %v1399
    %v1580 = vpop.f32.mrf.mxu0
    %v1581 = vadd.f32 %v1178, %v1580
    %v1582 = vpop.f32.mrf.mxu0
    %v1583 = vadd.f32 %v1183, %v1582
    %1584 = vmatmul.bf16.gmra.mxu0 %v1401
    %v1585 = vpop.f32.mrf.mxu0
    %v1586 = vadd.f32 %v1188, %v1585
    %v1587 = vpop.f32.mrf.mxu0
    %v1588 = vadd.f32 %v1193, %v1587
    %1589 = vmatmul.bf16.gmra.mxu0 %v1403
    %v1590 = vpop.f32.mrf.mxu0
    %v1591 = vadd.f32 %v1198, %v1590
    %v1592 = vpop.f32.mrf.mxu0
    %v1593 = vadd.f32 %v1203, %v1592
    %1594 = vmatmul.bf16.gmra.mxu0 %v1405
    %v1595 = vpop.f32.mrf.mxu0
    %v1596 = vadd.f32 %v1208, %v1595
    %v1597 = vpop.f32.mrf.mxu0
    %v1598 = vadd.f32 %v1213, %v1597
    %1599 = vmatmul.bf16.gmra.mxu0 %v1407
    %v1600 = vpop.f32.mrf.mxu0
    %v1601 = vadd.f32 %v1218, %v1600
    %v1602 = vpop.f32.mrf.mxu0
    %v1603 = vadd.f32 %v1223, %v1602
    %1604 = vmatmul.bf16.gmra.mxu0 %v1409
    %v1605 = vpop.f32.mrf.mxu0
    %v1606 = vadd.f32 %v1228, %v1605
    %v1607 = vpop.f32.mrf.mxu0
    %v1608 = vadd.f32 %v1233, %v1607
    %1609 = vmatmul.bf16.gmra.mxu0 %v1411
    %v1610 = vpop.f32.mrf.mxu0
    %v1611 = vadd.f32 %v1238, %v1610
    %v1612 = vpop.f32.mrf.mxu0
    %v1613 = vadd.f32 %v1243, %v1612
    %1614 = vmatmul.bf16.gmra.mxu0 %v1413
    %v1615 = vpop.f32.mrf.mxu0
    %v1616 = vadd.f32 %v1248, %v1615
    %v1617 = vpop.f32.mrf.mxu0
    %v1618 = vadd.f32 %v1253, %v1617
    %1619 = vmatmul.bf16.gmra.mxu0 %v1415
    %v1620 = vpop.f32.mrf.mxu0
    %v1621 = vadd.f32 %v1258, %v1620
    %v1622 = vpop.f32.mrf.mxu0
    %v1623 = vadd.f32 %v1263, %v1622
    %1624 = vmatmul.bf16.gmra.mxu0 %v1417
    %v1625 = vpop.f32.mrf.mxu0
    %v1626 = vadd.f32 %v1268, %v1625
    %v1627 = vpop.f32.mrf.mxu0
    %v1628 = vadd.f32 %v1273, %v1627
    %1629 = vmatmul.bf16.gmra.mxu0 %v1419
    %v1630 = vpop.f32.mrf.mxu0
    %v1631 = vadd.f32 %v1278, %v1630
    %v1632 = vpop.f32.mrf.mxu0
    %v1633 = vadd.f32 %v1283, %v1632
    %1634 = vmatmul.bf16.gmra.mxu0 %v1421
    %v1635 = vpop.f32.mrf.mxu0
    %v1636 = vadd.f32 %v1288, %v1635
    %v1637 = vpop.f32.mrf.mxu0
    %v1638 = vadd.f32 %v1293, %v1637
    %1639 = vdwg.mxu0
    %1640 = vmatpush.bf16.msra.mxu0 %v1534
    %1641 = vmatpush.bf16.msra.mxu0 %v1533
    %1642 = vmatpush.bf16.msra.mxu0 %v1532
    %1643 = vmatpush.bf16.msra.mxu0 %v1531
    %1644 = vmatpush.bf16.msra.mxu0 %v1530
    %1645 = vmatpush.bf16.msra.mxu0 %v1529
    %1646 = vmatpush.bf16.msra.mxu0 %v1528
    %1647 = vmatpush.bf16.msra.mxu0 %v1527
    %1648 = vmatmul.bf16.gmra.mxu0 %v1392
    %v1649 = vpop.f32.mrf.mxu0
    %v1650 = vadd.f32 %v1561, %v1649
    %v1651 = vpop.f32.mrf.mxu0
    %v1652 = vadd.f32 %v1563, %v1651
    %1653 = vmatmul.bf16.gmra.mxu0 %v1394
    %v1654 = vpop.f32.mrf.mxu0
    %v1655 = vadd.f32 %v1566, %v1654
    %v1656 = vpop.f32.mrf.mxu0
    %v1657 = vadd.f32 %v1568, %v1656
    %1658 = vmatmul.bf16.gmra.mxu0 %v1396
    %v1659 = vpop.f32.mrf.mxu0
    %v1660 = vadd.f32 %v1571, %v1659
    %v1661 = vpop.f32.mrf.mxu0
    %v1662 = vadd.f32 %v1573, %v1661
    %1663 = vmatmul.bf16.gmra.mxu0 %v1398
    %v1664 = vpop.f32.mrf.mxu0
    %v1665 = vadd.f32 %v1576, %v1664
    %v1666 = vpop.f32.mrf.mxu0
    %v1667 = vadd.f32 %v1578, %v1666
    %1668 = vmatmul.bf16.gmra.mxu0 %v1400
    %v1669 = vpop.f32.mrf.mxu0
    %v1670 = vadd.f32 %v1581, %v1669
    %v1671 = vpop.f32.mrf.mxu0
    %v1672 = vadd.f32 %v1583, %v1671
    %1673 = vmatmul.bf16.gmra.mxu0 %v1402
    %v1674 = vpop.f32.mrf.mxu0
    %v1675 = vadd.f32 %v1586, %v1674
    %v1676 = vpop.f32.mrf.mxu0
    %v1677 = vadd.f32 %v1588, %v1676
    %1678 = vmatmul.bf16.gmra.mxu0 %v1404
    %v1679 = vpop.f32.mrf.mxu0
    %v1680 = vadd.f32 %v1591, %v1679
    %v1681 = vpop.f32.mrf.mxu0
    %v1682 = vadd.f32 %v1593, %v1681
    %1683 = vmatmul.bf16.gmra.mxu0 %v1406
    %v1684 = vpop.f32.mrf.mxu0
    %v1685 = vadd.f32 %v1596, %v1684
    %v1686 = vpop.f32.mrf.mxu0
    %v1687 = vadd.f32 %v1598, %v1686
    %1688 = vmatmul.bf16.gmra.mxu0 %v1408
    %v1689 = vpop.f32.mrf.mxu0
    %v1690 = vadd.f32 %v1601, %v1689
    %v1691 = vpop.f32.mrf.mxu0
    %v1692 = vadd.f32 %v1603, %v1691
    %1693 = vmatmul.bf16.gmra.mxu0 %v1410
    %v1694 = vpop.f32.mrf.mxu0
    %v1695 = vadd.f32 %v1606, %v1694
    %v1696 = vpop.f32.mrf.mxu0
    %v1697 = vadd.f32 %v1608, %v1696
    %1698 = vmatmul.bf16.gmra.mxu0 %v1412
    %v1699 = vpop.f32.mrf.mxu0
    %v1700 = vadd.f32 %v1611, %v1699
    %v1701 = vpop.f32.mrf.mxu0
    %v1702 = vadd.f32 %v1613, %v1701
    %1703 = vmatmul.bf16.gmra.mxu0 %v1414
    %v1704 = vpop.f32.mrf.mxu0
    %v1705 = vadd.f32 %v1616, %v1704
    %v1706 = vpop.f32.mrf.mxu0
    %v1707 = vadd.f32 %v1618, %v1706
    %1708 = vmatmul.bf16.gmra.mxu0 %v1416
    %v1709 = vpop.f32.mrf.mxu0
    %v1710 = vadd.f32 %v1621, %v1709
    %v1711 = vpop.f32.mrf.mxu0
    %v1712 = vadd.f32 %v1623, %v1711
    %1713 = vmatmul.bf16.gmra.mxu0 %v1418
    %v1714 = vpop.f32.mrf.mxu0
    %v1715 = vadd.f32 %v1626, %v1714
    %v1716 = vpop.f32.mrf.mxu0
    %v1717 = vadd.f32 %v1628, %v1716
    %1718 = vmatmul.bf16.gmra.mxu0 %v1420
    %v1719 = vpop.f32.mrf.mxu0
    %v1720 = vadd.f32 %v1631, %v1719
    %v1721 = vpop.f32.mrf.mxu0
    %v1722 = vadd.f32 %v1633, %v1721
    %1723 = vmatmul.bf16.gmra.mxu0 %v1422
    %v1724 = vpop.f32.mrf.mxu0
    %v1725 = vadd.f32 %v1636, %v1724
    %v1726 = vpop.f32.mrf.mxu0
    %v1727 = vadd.f32 %v1638, %v1726
    %1728 = vdwg.mxu0
    %v1729 = vmax.f32 %v1650, 0.0
    %v1730 = vmax.f32 %v1652, 0.0
    %v1731 = vmax.f32 %v1655, 0.0
    %v1732 = vmax.f32 %v1657, 0.0
    %v1733 = vmax.f32 %v1660, 0.0
    %v1734 = vmax.f32 %v1662, 0.0
    %v1735 = vmax.f32 %v1665, 0.0
    %v1736 = vmax.f32 %v1667, 0.0
    %v1737 = vmax.f32 %v1670, 0.0
    %v1738 = vmax.f32 %v1672, 0.0
    %v1739 = vmax.f32 %v1675, 0.0
    %v1740 = vmax.f32 %v1677, 0.0
    %v1741 = vmax.f32 %v1680, 0.0
    %v1742 = vmax.f32 %v1682, 0.0
    %v1743 = vmax.f32 %v1685, 0.0
    %v1744 = vmax.f32 %v1687, 0.0
    %v1745 = vmax.f32 %v1690, 0.0
    %v1746 = vmax.f32 %v1692, 0.0
    %v1747 = vmax.f32 %v1695, 0.0
    %v1748 = vmax.f32 %v1697, 0.0
    %v1749 = vmax.f32 %v1700, 0.0
    %v1750 = vmax.f32 %v1702, 0.0
    %v1751 = vmax.f32 %v1705, 0.0
    %v1752 = vmax.f32 %v1707, 0.0
    %v1753 = vmax.f32 %v1710, 0.0
    %v1754 = vmax.f32 %v1712, 0.0
    %v1755 = vmax.f32 %v1715, 0.0
    %v1756 = vmax.f32 %v1717, 0.0
    %v1757 = vmax.f32 %v1720, 0.0
    %v1758 = vmax.f32 %v1722, 0.0
    %v1759 = vmax.f32 %v1725, 0.0
    %v1760 = vmax.f32 %v1727, 0.0
    %v1761 = vld [vmem:[%s4] sm:$0xff]
    %v1762 = vld [vmem:[%s4 + $0x8] sm:$0xff]
    %v1763 = vld [vmem:[%s4 + $0x10] sm:$0xff]
    %v1764 = vld [vmem:[%s4 + $0x18] sm:$0xff]
    %v1765 = vld [vmem:[%s4 + $0x20] sm:$0xff]
    %v1766 = vld [vmem:[%s4 + $0x28] sm:$0xff]
    %v1767 = vld [vmem:[%s4 + $0x30] sm:$0xff]
    %v1768 = vld [vmem:[%s4 + $0x38] sm:$0xff]
    %v1769 = vld [vmem:[%s4 + $0x40] sm:$0xff]
    %v1770 = vld [vmem:[%s4 + $0x48] sm:$0xff]
    %v1771 = vld [vmem:[%s4 + $0x50] sm:$0xff]
    %v1772 = vld [vmem:[%s4 + $0x58] sm:$0xff]
    %v1773 = vld [vmem:[%s4 + $0x60] sm:$0xff]
    %v1774 = vld [vmem:[%s4 + $0x68] sm:$0xff]
    %v1775 = vld [vmem:[%s4 + $0x70] sm:$0xff]
    %v1776 = vld [vmem:[%s4 + $0x78] sm:$0xff]
    %v1777 = vld [vmem:[%s4 + $0x80] sm:$0xff]
    %v1778 = vld [vmem:[%s4 + $0x88] sm:$0xff]
    %v1779 = vld [vmem:[%s4 + $0x90] sm:$0xff]
    %v1780 = vld [vmem:[%s4 + $0x98] sm:$0xff]
    %v1781 = vld [vmem:[%s4 + $0xa0] sm:$0xff]
    %v1782 = vld [vmem:[%s4 + $0xa8] sm:$0xff]
    %v1783 = vld [vmem:[%s4 + $0xb0] sm:$0xff]
    %v1784 = vld [vmem:[%s4 + $0xb8] sm:$0xff]
    %v1785 = vld [vmem:[%s4 + $0xc0] sm:$0xff]
    %v1786 = vld [vmem:[%s4 + $0xc8] sm:$0xff]
    %v1787 = vld [vmem:[%s4 + $0xd0] sm:$0xff]
    %v1788 = vld [vmem:[%s4 + $0xd8] sm:$0xff]
    %v1789 = vld [vmem:[%s4 + $0xe0] sm:$0xff]
    %v1790 = vld [vmem:[%s4 + $0xe8] sm:$0xff]
    %v1791 = vld [vmem:[%s4 + $0xf0] sm:$0xff]
    %v1792 = vld [vmem:[%s4 + $0xf8] sm:$0xff]
    %1794 = vset.pattern.permute.xlu0 0
    %1795 = vperm.xlu0 %1794, %v1071
    %v1796 = vpop.permute.xlu0 %1795
    %1799 = vset.pattern.permute.xlu0 0
    %1800 = vperm.xlu0 %1799, %v1072
    %v1801 = vpop.permute.xlu0 %1800
    %1804 = vset.pattern.permute.xlu0 0
    %1805 = vperm.xlu0 %1804, %v1073
    %v1806 = vpop.permute.xlu0 %1805
    %1809 = vset.pattern.permute.xlu0 0
    %1810 = vperm.xlu0 %1809, %v1074
    %v1811 = vpop.permute.xlu0 %1810
    %1814 = vset.pattern.permute.xlu0 0
    %1815 = vperm.xlu0 %1814, %v1075
    %v1816 = vpop.permute.xlu0 %1815
    %1819 = vset.pattern.permute.xlu0 0
    %1820 = vperm.xlu0 %1819, %v1076
    %v1821 = vpop.permute.xlu0 %1820
    %1824 = vset.pattern.permute.xlu0 0
    %1825 = vperm.xlu0 %1824, %v1077
    %v1826 = vpop.permute.xlu0 %1825
    %1829 = vset.pattern.permute.xlu0 0
    %1830 = vperm.xlu0 %1829, %v1078
    %v1831 = vpop.permute.xlu0 %1830
    %1834 = vset.pattern.permute.xlu0 0
    %1835 = vperm.xlu0 %1834, %v1079
    %v1836 = vpop.permute.xlu0 %1835
    %1839 = vset.pattern.permute.xlu0 0
    %1840 = vperm.xlu0 %1839, %v1080
    %v1841 = vpop.permute.xlu0 %1840
    %1844 = vset.pattern.permute.xlu0 0
    %1845 = vperm.xlu0 %1844, %v1081
    %v1846 = vpop.permute.xlu0 %1845
    %1849 = vset.pattern.permute.xlu0 0
    %1850 = vperm.xlu0 %1849, %v1082
    %v1851 = vpop.permute.xlu0 %1850
    %1854 = vset.pattern.permute.xlu0 0
    %1855 = vperm.xlu0 %1854, %v1083
    %v1856 = vpop.permute.xlu0 %1855
    %1859 = vset.pattern.permute.xlu0 0
    %1860 = vperm.xlu0 %1859, %v1084
    %v1861 = vpop.permute.xlu0 %1860
    %1864 = vset.pattern.permute.xlu0 0
    %1865 = vperm.xlu0 %1864, %v1085
    %v1866 = vpop.permute.xlu0 %1865
    %1869 = vset.pattern.permute.xlu0 0
    %1870 = vperm.xlu0 %1869, %v1086
    %v1871 = vpop.permute.xlu0 %1870
    %1874 = vset.pattern.permute.xlu0 0
    %1875 = vperm.xlu0 %1874, %v1087
    %v1876 = vpop.permute.xlu0 %1875
    %1879 = vset.pattern.permute.xlu0 0
    %1880 = vperm.xlu0 %1879, %v1088
    %v1881 = vpop.permute.xlu0 %1880
    %1884 = vset.pattern.permute.xlu0 0
    %1885 = vperm.xlu0 %1884, %v1089
    %v1886 = vpop.permute.xlu0 %1885
    %1889 = vset.pattern.permute.xlu0 0
    %1890 = vperm.xlu0 %1889, %v1090
    %v1891 = vpop.permute.xlu0 %1890
    %1894 = vset.pattern.permute.xlu0 0
    %1895 = vperm.xlu0 %1894, %v1091
    %v1896 = vpop.permute.xlu0 %1895
    %1899 = vset.pattern.permute.xlu0 0
    %1900 = vperm.xlu0 %1899, %v1092
    %v1901 = vpop.permute.xlu0 %1900
    %1904 = vset.pattern.permute.xlu0 0
    %1905 = vperm.xlu0 %1904, %v1093
    %v1906 = vpop.permute.xlu0 %1905
    %1909 = vset.pattern.permute.xlu0 0
    %1910 = vperm.xlu0 %1909, %v1094
    %v1911 = vpop.permute.xlu0 %1910
    %1914 = vset.pattern.permute.xlu0 0
    %1915 = vperm.xlu0 %1914, %v1095
    %v1916 = vpop.permute.xlu0 %1915
    %1919 = vset.pattern.permute.xlu0 0
    %1920 = vperm.xlu0 %1919, %v1096
    %v1921 = vpop.permute.xlu0 %1920
    %1924 = vset.pattern.permute.xlu0 0
    %1925 = vperm.xlu0 %1924, %v1097
    %v1926 = vpop.permute.xlu0 %1925
    %1929 = vset.pattern.permute.xlu0 0
    %1930 = vperm.xlu0 %1929, %v1098
    %v1931 = vpop.permute.xlu0 %1930
    %1934 = vset.pattern.permute.xlu0 0
    %1935 = vperm.xlu0 %1934, %v1099
    %v1936 = vpop.permute.xlu0 %1935
    %1939 = vset.pattern.permute.xlu0 0
    %1940 = vperm.xlu0 %1939, %v1100
    %v1941 = vpop.permute.xlu0 %1940
    %1944 = vset.pattern.permute.xlu0 0
    %1945 = vperm.xlu0 %1944, %v1101
    %v1946 = vpop.permute.xlu0 %1945
    %1949 = vset.pattern.permute.xlu0 0
    %1950 = vperm.xlu0 %1949, %v1102
    %v1951 = vpop.permute.xlu0 %1950
    %v1985 = vunpack.c.l.b16 %v1761
    %v1986 = vunpack.c.h.b16 %v1761
    %v1987 = vunpack.c.l.b16 %v1762
    %v1988 = vunpack.c.h.b16 %v1762
    %v1989 = vunpack.c.l.b16 %v1763
    %v1990 = vunpack.c.h.b16 %v1763
    %v1991 = vunpack.c.l.b16 %v1764
    %v1992 = vunpack.c.h.b16 %v1764
    %v1993 = vunpack.c.l.b16 %v1765
    %v1994 = vunpack.c.h.b16 %v1765
    %v1995 = vunpack.c.l.b16 %v1766
    %v1996 = vunpack.c.h.b16 %v1766
    %v1997 = vunpack.c.l.b16 %v1767
    %v1998 = vunpack.c.h.b16 %v1767
    %v1999 = vunpack.c.l.b16 %v1768
    %v2000 = vunpack.c.h.b16 %v1768
    %v2001 = vunpack.c.l.b16 %v1769
    %v2002 = vunpack.c.h.b16 %v1769
    %v2003 = vunpack.c.l.b16 %v1770
    %v2004 = vunpack.c.h.b16 %v1770
    %v2005 = vunpack.c.l.b16 %v1771
    %v2006 = vunpack.c.h.b16 %v1771
    %v2007 = vunpack.c.l.b16 %v1772
    %v2008 = vunpack.c.h.b16 %v1772
    %v2009 = vunpack.c.l.b16 %v1773
    %v2010 = vunpack.c.h.b16 %v1773
    %v2011 = vunpack.c.l.b16 %v1774
    %v2012 = vunpack.c.h.b16 %v1774
    %v2013 = vunpack.c.l.b16 %v1775
    %v2014 = vunpack.c.h.b16 %v1775
    %v2015 = vunpack.c.l.b16 %v1776
    %v2016 = vunpack.c.h.b16 %v1776
    %v2017 = vunpack.c.l.b16 %v1777
    %v2018 = vunpack.c.h.b16 %v1777
    %v2019 = vunpack.c.l.b16 %v1778
    %v2020 = vunpack.c.h.b16 %v1778
    %v2021 = vunpack.c.l.b16 %v1779
    %v2022 = vunpack.c.h.b16 %v1779
    %v2023 = vunpack.c.l.b16 %v1780
    %v2024 = vunpack.c.h.b16 %v1780
    %v2025 = vunpack.c.l.b16 %v1781
    %v2026 = vunpack.c.h.b16 %v1781
    %v2027 = vunpack.c.l.b16 %v1782
    %v2028 = vunpack.c.h.b16 %v1782
    %v2029 = vunpack.c.l.b16 %v1783
    %v2030 = vunpack.c.h.b16 %v1783
    %v2031 = vunpack.c.l.b16 %v1784
    %v2032 = vunpack.c.h.b16 %v1784
    %v2033 = vunpack.c.l.b16 %v1785
    %v2034 = vunpack.c.h.b16 %v1785
    %v2035 = vunpack.c.l.b16 %v1786
    %v2036 = vunpack.c.h.b16 %v1786
    %v2037 = vunpack.c.l.b16 %v1787
    %v2038 = vunpack.c.h.b16 %v1787
    %v2039 = vunpack.c.l.b16 %v1788
    %v2040 = vunpack.c.h.b16 %v1788
    %v2041 = vunpack.c.l.b16 %v1789
    %v2042 = vunpack.c.h.b16 %v1789
    %v2043 = vunpack.c.l.b16 %v1790
    %v2044 = vunpack.c.h.b16 %v1790
    %v2045 = vunpack.c.l.b16 %v1791
    %v2046 = vunpack.c.h.b16 %v1791
    %v2047 = vunpack.c.l.b16 %v1792
    %v2048 = vunpack.c.h.b16 %v1792
    %v2049 = vpack.c.b16 %v1987, %v1985
    %v2050 = vpack.c.b16 %v1988, %v1986
    %v2051 = vpack.c.b16 %v1991, %v1989
    %v2052 = vpack.c.b16 %v1992, %v1990
    %v2053 = vpack.c.b16 %v1995, %v1993
    %v2054 = vpack.c.b16 %v1996, %v1994
    %v2055 = vpack.c.b16 %v1999, %v1997
    %v2056 = vpack.c.b16 %v2000, %v1998
    %v2057 = vpack.c.b16 %v2003, %v2001
    %v2058 = vpack.c.b16 %v2004, %v2002
    %v2059 = vpack.c.b16 %v2007, %v2005
    %v2060 = vpack.c.b16 %v2008, %v2006
    %v2061 = vpack.c.b16 %v2011, %v2009
    %v2062 = vpack.c.b16 %v2012, %v2010
    %v2063 = vpack.c.b16 %v2015, %v2013
    %v2064 = vpack.c.b16 %v2016, %v2014
    %v2065 = vpack.c.b16 %v2019, %v2017
    %v2066 = vpack.c.b16 %v2020, %v2018
    %v2067 = vpack.c.b16 %v2023, %v2021
    %v2068 = vpack.c.b16 %v2024, %v2022
    %v2069 = vpack.c.b16 %v2027, %v2025
    %v2070 = vpack.c.b16 %v2028, %v2026
    %v2071 = vpack.c.b16 %v2031, %v2029
    %v2072 = vpack.c.b16 %v2032, %v2030
    %v2073 = vpack.c.b16 %v2035, %v2033
    %v2074 = vpack.c.b16 %v2036, %v2034
    %v2075 = vpack.c.b16 %v2039, %v2037
    %v2076 = vpack.c.b16 %v2040, %v2038
    %v2077 = vpack.c.b16 %v2043, %v2041
    %v2078 = vpack.c.b16 %v2044, %v2042
    %v2079 = vpack.c.b16 %v2047, %v2045
    %v2080 = vpack.c.b16 %v2048, %v2046
    %v2145 = vunpack.c.l.b16 %v1007
    %v2146 = vunpack.c.l.b16 %v1008
    %v2147 = vunpack.c.l.b16 %v1009
    %v2148 = vunpack.c.l.b16 %v1010
    %v2149 = vunpack.c.l.b16 %v1011
    %v2150 = vunpack.c.l.b16 %v1012
    %v2151 = vunpack.c.l.b16 %v1013
    %v2152 = vunpack.c.l.b16 %v1014
    %v2153 = vunpack.c.l.b16 %v1015
    %v2154 = vunpack.c.l.b16 %v1016
    %v2155 = vunpack.c.l.b16 %v1017
    %v2156 = vunpack.c.l.b16 %v1018
    %v2157 = vunpack.c.l.b16 %v1019
    %v2158 = vunpack.c.l.b16 %v1020
    %v2159 = vunpack.c.l.b16 %v1021
    %v2160 = vunpack.c.l.b16 %v1022
    %v2161 = vunpack.c.l.b16 %v1023
    %v2162 = vunpack.c.l.b16 %v1024
    %v2163 = vunpack.c.l.b16 %v1025
    %v2164 = vunpack.c.l.b16 %v1026
    %v2165 = vunpack.c.l.b16 %v1027
    %v2166 = vunpack.c.l.b16 %v1028
    %v2167 = vunpack.c.l.b16 %v1029
    %v2168 = vunpack.c.l.b16 %v1030
    %v2169 = vunpack.c.l.b16 %v1031
    %v2170 = vunpack.c.l.b16 %v1032
    %v2171 = vunpack.c.l.b16 %v1033
    %v2172 = vunpack.c.l.b16 %v1034
    %v2173 = vunpack.c.l.b16 %v1035
    %v2174 = vunpack.c.l.b16 %v1036
    %v2175 = vunpack.c.l.b16 %v1037
    %v2176 = vunpack.c.l.b16 %v1038
    %v2177 = vpack.c.b16 %v2146, %v2145
    %v2178 = vpack.c.b16 %v2148, %v2147
    %v2179 = vpack.c.b16 %v2150, %v2149
    %v2180 = vpack.c.b16 %v2152, %v2151
    %v2181 = vpack.c.b16 %v2154, %v2153
    %v2182 = vpack.c.b16 %v2156, %v2155
    %v2183 = vpack.c.b16 %v2158, %v2157
    %v2184 = vpack.c.b16 %v2160, %v2159
    %v2185 = vpack.c.b16 %v2162, %v2161
    %v2186 = vpack.c.b16 %v2164, %v2163
    %v2187 = vpack.c.b16 %v2166, %v2165
    %v2188 = vpack.c.b16 %v2168, %v2167
    %v2189 = vpack.c.b16 %v2170, %v2169
    %v2190 = vpack.c.b16 %v2172, %v2171
    %v2191 = vpack.c.b16 %v2174, %v2173
    %v2192 = vpack.c.b16 %v2176, %v2175
    %2209 = vmatpush.bf16.msra.mxu0 %v2184
    %2210 = vmatpush.bf16.msra.mxu0 %v2183
    %2211 = vmatpush.bf16.msra.mxu0 %v2182
    %2212 = vmatpush.bf16.msra.mxu0 %v2181
    %2213 = vmatpush.bf16.msra.mxu0 %v2180
    %2214 = vmatpush.bf16.msra.mxu0 %v2179
    %2215 = vmatpush.bf16.msra.mxu0 %v2178
    %2216 = vmatpush.bf16.msra.mxu0 %v2177
    %2217 = vmatmul.bf16.gmra.mxu0 %v2049
    %v2218 = vpop.f32.mrf.mxu0
    %v2219 = vadd.f32 %v1796, %v2218
    %v2220 = vpop.f32.mrf.mxu0
    %v2221 = vadd.f32 %v1801, %v2220
    %2222 = vmatmul.bf16.gmra.mxu0 %v2051
    %v2223 = vpop.f32.mrf.mxu0
    %v2224 = vadd.f32 %v1806, %v2223
    %v2225 = vpop.f32.mrf.mxu0
    %v2226 = vadd.f32 %v1811, %v2225
    %2227 = vmatmul.bf16.gmra.mxu0 %v2053
    %v2228 = vpop.f32.mrf.mxu0
    %v2229 = vadd.f32 %v1816, %v2228
    %v2230 = vpop.f32.mrf.mxu0
    %v2231 = vadd.f32 %v1821, %v2230
    %2232 = vmatmul.bf16.gmra.mxu0 %v2055
    %v2233 = vpop.f32.mrf.mxu0
    %v2234 = vadd.f32 %v1826, %v2233
    %v2235 = vpop.f32.mrf.mxu0
    %v2236 = vadd.f32 %v1831, %v2235
    %2237 = vmatmul.bf16.gmra.mxu0 %v2057
    %v2238 = vpop.f32.mrf.mxu0
    %v2239 = vadd.f32 %v1836, %v2238
    %v2240 = vpop.f32.mrf.mxu0
    %v2241 = vadd.f32 %v1841, %v2240
    %2242 = vmatmul.bf16.gmra.mxu0 %v2059
    %v2243 = vpop.f32.mrf.mxu0
    %v2244 = vadd.f32 %v1846, %v2243
    %v2245 = vpop.f32.mrf.mxu0
    %v2246 = vadd.f32 %v1851, %v2245
    %2247 = vmatmul.bf16.gmra.mxu0 %v2061
    %v2248 = vpop.f32.mrf.mxu0
    %v2249 = vadd.f32 %v1856, %v2248
    %v2250 = vpop.f32.mrf.mxu0
    %v2251 = vadd.f32 %v1861, %v2250
    %2252 = vmatmul.bf16.gmra.mxu0 %v2063
    %v2253 = vpop.f32.mrf.mxu0
    %v2254 = vadd.f32 %v1866, %v2253
    %v2255 = vpop.f32.mrf.mxu0
    %v2256 = vadd.f32 %v1871, %v2255
    %2257 = vmatmul.bf16.gmra.mxu0 %v2065
    %v2258 = vpop.f32.mrf.mxu0
    %v2259 = vadd.f32 %v1876, %v2258
    %v2260 = vpop.f32.mrf.mxu0
    %v2261 = vadd.f32 %v1881, %v2260
    %2262 = vmatmul.bf16.gmra.mxu0 %v2067
    %v2263 = vpop.f32.mrf.mxu0
    %v2264 = vadd.f32 %v1886, %v2263
    %v2265 = vpop.f32.mrf.mxu0
    %v2266 = vadd.f32 %v1891, %v2265
    %2267 = vmatmul.bf16.gmra.mxu0 %v2069
    %v2268 = vpop.f32.mrf.mxu0
    %v2269 = vadd.f32 %v1896, %v2268
    %v2270 = vpop.f32.mrf.mxu0
    %v2271 = vadd.f32 %v1901, %v2270
    %2272 = vmatmul.bf16.gmra.mxu0 %v2071
    %v2273 = vpop.f32.mrf.mxu0
    %v2274 = vadd.f32 %v1906, %v2273
    %v2275 = vpop.f32.mrf.mxu0
    %v2276 = vadd.f32 %v1911, %v2275
    %2277 = vmatmul.bf16.gmra.mxu0 %v2073
    %v2278 = vpop.f32.mrf.mxu0
    %v2279 = vadd.f32 %v1916, %v2278
    %v2280 = vpop.f32.mrf.mxu0
    %v2281 = vadd.f32 %v1921, %v2280
    %2282 = vmatmul.bf16.gmra.mxu0 %v2075
    %v2283 = vpop.f32.mrf.mxu0
    %v2284 = vadd.f32 %v1926, %v2283
    %v2285 = vpop.f32.mrf.mxu0
    %v2286 = vadd.f32 %v1931, %v2285
    %2287 = vmatmul.bf16.gmra.mxu0 %v2077
    %v2288 = vpop.f32.mrf.mxu0
    %v2289 = vadd.f32 %v1936, %v2288
    %v2290 = vpop.f32.mrf.mxu0
    %v2291 = vadd.f32 %v1941, %v2290
    %2292 = vmatmul.bf16.gmra.mxu0 %v2079
    %v2293 = vpop.f32.mrf.mxu0
    %v2294 = vadd.f32 %v1946, %v2293
    %v2295 = vpop.f32.mrf.mxu0
    %v2296 = vadd.f32 %v1951, %v2295
    %2297 = vdwg.mxu0
    %2298 = vmatpush.bf16.msra.mxu0 %v2192
    %2299 = vmatpush.bf16.msra.mxu0 %v2191
    %2300 = vmatpush.bf16.msra.mxu0 %v2190
    %2301 = vmatpush.bf16.msra.mxu0 %v2189
    %2302 = vmatpush.bf16.msra.mxu0 %v2188
    %2303 = vmatpush.bf16.msra.mxu0 %v2187
    %2304 = vmatpush.bf16.msra.mxu0 %v2186
    %2305 = vmatpush.bf16.msra.mxu0 %v2185
    %2306 = vmatmul.bf16.gmra.mxu0 %v2050
    %v2307 = vpop.f32.mrf.mxu0
    %v2308 = vadd.f32 %v2219, %v2307
    %v2309 = vpop.f32.mrf.mxu0
    %v2310 = vadd.f32 %v2221, %v2309
    %2311 = vmatmul.bf16.gmra.mxu0 %v2052
    %v2312 = vpop.f32.mrf.mxu0
    %v2313 = vadd.f32 %v2224, %v2312
    %v2314 = vpop.f32.mrf.mxu0
    %v2315 = vadd.f32 %v2226, %v2314
    %2316 = vmatmul.bf16.gmra.mxu0 %v2054
    %v2317 = vpop.f32.mrf.mxu0
    %v2318 = vadd.f32 %v2229, %v2317
    %v2319 = vpop.f32.mrf.mxu0
    %v2320 = vadd.f32 %v2231, %v2319
    %2321 = vmatmul.bf16.gmra.mxu0 %v2056
    %v2322 = vpop.f32.mrf.mxu0
    %v2323 = vadd.f32 %v2234, %v2322
    %v2324 = vpop.f32.mrf.mxu0
    %v2325 = vadd.f32 %v2236, %v2324
    %2326 = vmatmul.bf16.gmra.mxu0 %v2058
    %v2327 = vpop.f32.mrf.mxu0
    %v2328 = vadd.f32 %v2239, %v2327
    %v2329 = vpop.f32.mrf.mxu0
    %v2330 = vadd.f32 %v2241, %v2329
    %2331 = vmatmul.bf16.gmra.mxu0 %v2060
    %v2332 = vpop.f32.mrf.mxu0
    %v2333 = vadd.f32 %v2244, %v2332
    %v2334 = vpop.f32.mrf.mxu0
    %v2335 = vadd.f32 %v2246, %v2334
    %2336 = vmatmul.bf16.gmra.mxu0 %v2062
    %v2337 = vpop.f32.mrf.mxu0
    %v2338 = vadd.f32 %v2249, %v2337
    %v2339 = vpop.f32.mrf.mxu0
    %v2340 = vadd.f32 %v2251, %v2339
    %2341 = vmatmul.bf16.gmra.mxu0 %v2064
    %v2342 = vpop.f32.mrf.mxu0
    %v2343 = vadd.f32 %v2254, %v2342
    %v2344 = vpop.f32.mrf.mxu0
    %v2345 = vadd.f32 %v2256, %v2344
    %2346 = vmatmul.bf16.gmra.mxu0 %v2066
    %v2347 = vpop.f32.mrf.mxu0
    %v2348 = vadd.f32 %v2259, %v2347
    %v2349 = vpop.f32.mrf.mxu0
    %v2350 = vadd.f32 %v2261, %v2349
    %2351 = vmatmul.bf16.gmra.mxu0 %v2068
    %v2352 = vpop.f32.mrf.mxu0
    %v2353 = vadd.f32 %v2264, %v2352
    %v2354 = vpop.f32.mrf.mxu0
    %v2355 = vadd.f32 %v2266, %v2354
    %2356 = vmatmul.bf16.gmra.mxu0 %v2070
    %v2357 = vpop.f32.mrf.mxu0
    %v2358 = vadd.f32 %v2269, %v2357
    %v2359 = vpop.f32.mrf.mxu0
    %v2360 = vadd.f32 %v2271, %v2359
    %2361 = vmatmul.bf16.gmra.mxu0 %v2072
    %v2362 = vpop.f32.mrf.mxu0
    %v2363 = vadd.f32 %v2274, %v2362
    %v2364 = vpop.f32.mrf.mxu0
    %v2365 = vadd.f32 %v2276, %v2364
    %2366 = vmatmul.bf16.gmra.mxu0 %v2074
    %v2367 = vpop.f32.mrf.mxu0
    %v2368 = vadd.f32 %v2279, %v2367
    %v2369 = vpop.f32.mrf.mxu0
    %v2370 = vadd.f32 %v2281, %v2369
    %2371 = vmatmul.bf16.gmra.mxu0 %v2076
    %v2372 = vpop.f32.mrf.mxu0
    %v2373 = vadd.f32 %v2284, %v2372
    %v2374 = vpop.f32.mrf.mxu0
    %v2375 = vadd.f32 %v2286, %v2374
    %2376 = vmatmul.bf16.gmra.mxu0 %v2078
    %v2377 = vpop.f32.mrf.mxu0
    %v2378 = vadd.f32 %v2289, %v2377
    %v2379 = vpop.f32.mrf.mxu0
    %v2380 = vadd.f32 %v2291, %v2379
    %2381 = vmatmul.bf16.gmra.mxu0 %v2080
    %v2382 = vpop.f32.mrf.mxu0
    %v2383 = vadd.f32 %v2294, %v2382
    %v2384 = vpop.f32.mrf.mxu0
    %v2385 = vadd.f32 %v2296, %v2384
    %2386 = vdwg.mxu0
    %v2387 = vmax.f32 %v2308, 0.0
    %v2388 = vmax.f32 %v2310, 0.0
    %v2389 = vmax.f32 %v2313, 0.0
    %v2390 = vmax.f32 %v2315, 0.0
    %v2391 = vmax.f32 %v2318, 0.0
    %v2392 = vmax.f32 %v2320, 0.0
    %v2393 = vmax.f32 %v2323, 0.0
    %v2394 = vmax.f32 %v2325, 0.0
    %v2395 = vmax.f32 %v2328, 0.0
    %v2396 = vmax.f32 %v2330, 0.0
    %v2397 = vmax.f32 %v2333, 0.0
    %v2398 = vmax.f32 %v2335, 0.0
    %v2399 = vmax.f32 %v2338, 0.0
    %v2400 = vmax.f32 %v2340, 0.0
    %v2401 = vmax.f32 %v2343, 0.0
    %v2402 = vmax.f32 %v2345, 0.0
    %v2403 = vmax.f32 %v2348, 0.0
    %v2404 = vmax.f32 %v2350, 0.0
    %v2405 = vmax.f32 %v2353, 0.0
    %v2406 = vmax.f32 %v2355, 0.0
    %v2407 = vmax.f32 %v2358, 0.0
    %v2408 = vmax.f32 %v2360, 0.0
    %v2409 = vmax.f32 %v2363, 0.0
    %v2410 = vmax.f32 %v2365, 0.0
    %v2411 = vmax.f32 %v2368, 0.0
    %v2412 = vmax.f32 %v2370, 0.0
    %v2413 = vmax.f32 %v2373, 0.0
    %v2414 = vmax.f32 %v2375, 0.0
    %v2415 = vmax.f32 %v2378, 0.0
    %v2416 = vmax.f32 %v2380, 0.0
    %v2417 = vmax.f32 %v2383, 0.0
    %v2418 = vmax.f32 %v2385, 0.0
    %v2419 = vld [vmem:[%s6] sm:$0xf]
    %v2420 = vpack.c.bf16 %v1730, %v1729
    %v2421 = vpack.c.bf16 %v1732, %v1731
    %v2422 = vpack.c.bf16 %v1734, %v1733
    %v2423 = vpack.c.bf16 %v1736, %v1735
    %v2424 = vpack.c.bf16 %v1738, %v1737
    %v2425 = vpack.c.bf16 %v1740, %v1739
    %v2426 = vpack.c.bf16 %v1742, %v1741
    %v2427 = vpack.c.bf16 %v1744, %v1743
    %v2428 = vpack.c.bf16 %v1746, %v1745
    %v2429 = vpack.c.bf16 %v1748, %v1747
    %v2430 = vpack.c.bf16 %v1750, %v1749
    %v2431 = vpack.c.bf16 %v1752, %v1751
    %v2432 = vpack.c.bf16 %v1754, %v1753
    %v2433 = vpack.c.bf16 %v1756, %v1755
    %v2434 = vpack.c.bf16 %v1758, %v1757
    %v2435 = vpack.c.bf16 %v1760, %v1759
    %v2436 = vpack.c.bf16 %v2388, %v2387
    %v2437 = vpack.c.bf16 %v2390, %v2389
    %v2438 = vpack.c.bf16 %v2392, %v2391
    %v2439 = vpack.c.bf16 %v2394, %v2393
    %v2440 = vpack.c.bf16 %v2396, %v2395
    %v2441 = vpack.c.bf16 %v2398, %v2397
    %v2442 = vpack.c.bf16 %v2400, %v2399
    %v2443 = vpack.c.bf16 %v2402, %v2401
    %v2444 = vpack.c.bf16 %v2404, %v2403
    %v2445 = vpack.c.bf16 %v2406, %v2405
    %v2446 = vpack.c.bf16 %v2408, %v2407
    %v2447 = vpack.c.bf16 %v2410, %v2409
    %v2448 = vpack.c.bf16 %v2412, %v2411
    %v2449 = vpack.c.bf16 %v2414, %v2413
    %v2450 = vpack.c.bf16 %v2416, %v2415
    %v2451 = vpack.c.bf16 %v2418, %v2417
    %2453 = vst [vmem:[#allocation1] ss:$9 sm:$0xff] %v2419
    %v2454 = vld [vmem:[#allocation1 + $0x12] sm:$0xff]
    %v2455 = vld [vmem:[#allocation1 + $0x1b] sm:$0xff]
    %2458 = vmatpush.bf16.msra.mxu0 %v2443
    %2459 = vmatpush.bf16.msra.mxu0 %v2442
    %2460 = vmatpush.bf16.msra.mxu0 %v2441
    %2461 = vmatpush.bf16.msra.mxu0 %v2440
    %2462 = vmatpush.bf16.msra.mxu0 %v2439
    %2463 = vmatpush.bf16.msra.mxu0 %v2438
    %2464 = vmatpush.bf16.msra.mxu0 %v2437
    %2465 = vmatpush.bf16.msra.mxu0 %v2436
    %2466 = vmatmul.bf16.gmra.mxu0 %v2454
    %v2467 = vpop.f32.mrf.mxu0
    %v2468 = vadd.f32 0.0, %v2467
    %v2469 = vpop.f32.mrf.mxu0
    %2470 = vdwg.mxu0
    %2471 = vmatpush.bf16.msra.mxu0 %v2451
    %2472 = vmatpush.bf16.msra.mxu0 %v2450
    %2473 = vmatpush.bf16.msra.mxu0 %v2449
    %2474 = vmatpush.bf16.msra.mxu0 %v2448
    %2475 = vmatpush.bf16.msra.mxu0 %v2447
    %2476 = vmatpush.bf16.msra.mxu0 %v2446
    %2477 = vmatpush.bf16.msra.mxu0 %v2445
    %2478 = vmatpush.bf16.msra.mxu0 %v2444
    %2479 = vmatmul.bf16.gmra.mxu0 %v2455
    %v2480 = vpop.f32.mrf.mxu0
    %v2481 = vadd.f32 %v2468, %v2480
    %v2482 = vpop.f32.mrf.mxu0
    %2483 = vdwg.mxu0
    %2484 = vst [vmem:[#allocation1] ss:$9 sm:$0xff] %v2419
    %v2485 = vld [vmem:[#allocation1] sm:$0xff]
    %v2486 = vld [vmem:[#allocation1 + $0x9] sm:$0xff]
    %2489 = vmatpush.bf16.msra.mxu0 %v2427
    %2490 = vmatpush.bf16.msra.mxu0 %v2426
    %2491 = vmatpush.bf16.msra.mxu0 %v2425
    %2492 = vmatpush.bf16.msra.mxu0 %v2424
    %2493 = vmatpush.bf16.msra.mxu0 %v2423
    %2494 = vmatpush.bf16.msra.mxu0 %v2422
    %2495 = vmatpush.bf16.msra.mxu0 %v2421
    %2496 = vmatpush.bf16.msra.mxu0 %v2420
    %2497 = vmatmul.bf16.gmra.mxu0 %v2485
    %v2498 = vpop.f32.mrf.mxu0
    %v2499 = vadd.f32 %v2481, %v2498
    %v2500 = vpop.f32.mrf.mxu0
    %2501 = vdwg.mxu0
    %2502 = vmatpush.bf16.msra.mxu0 %v2435
    %2503 = vmatpush.bf16.msra.mxu0 %v2434
    %2504 = vmatpush.bf16.msra.mxu0 %v2433
    %2505 = vmatpush.bf16.msra.mxu0 %v2432
    %2506 = vmatpush.bf16.msra.mxu0 %v2431
    %2507 = vmatpush.bf16.msra.mxu0 %v2430
    %2508 = vmatpush.bf16.msra.mxu0 %v2429
    %2509 = vmatpush.bf16.msra.mxu0 %v2428
    %2510 = vmatmul.bf16.gmra.mxu0 %v2486
    %v2511 = vpop.f32.mrf.mxu0
    %v2512 = vadd.f32 %v2499, %v2511
    %v2513 = vpop.f32.mrf.mxu0
    %2514 = vdwg.mxu0
    %v2515 = vld [vmem:[%s7] sm:$0x3]
    %2517 = vset.pattern.permute.xlu0 0
    %2518 = vperm.xlu0 %2517, %v2515
    %v2519 = vpop.permute.xlu0 %2518
    %v2521 = vadd.f32 %v2512, %v2519
    %2522 = vst [vmem:[#allocation2] sm:$0x3] %v2521
    // Predicated region
    $region34: #{tpu_custom_call.1} parent=1 // pred_check
      _
    $region35: #{tpu_custom_call.1} parent=1 // pred_check_branch
      %2524 = sbr.rel (0) target = $region37
    $region36: #{tpu_custom_call.1} parent=1 // pred_region
      %2526 = vsyncadd [#allocation3], 0
      %s2528 = sshll.u32 [#allocation2], 4
      %s2529 = int_to_ptr.vmem [resolvable:$true] %s2528
      %s2530 = sshll.u32 %s8, 4
      %s2531 = int_to_ptr.hbm [resolvable:$true] %s2530
      %2533 = dma.vmem_to_hbm [thread:$0]  %s2529, 32, %s2531, [#allocation3]
    $region37: #{tpu_custom_call.1} parent=1 // pred_fallthru
      _
    // Predicated region
    $region38: #{tpu_custom_call.1} parent=1 // pred_check
      _
    $region39: #{tpu_custom_call.1} parent=1 // pred_check_branch
      %2535 = sbr.rel (0) target = $region41
    $region40: #{tpu_custom_call.1} parent=1 // pred_region
      %2537 = dma.done [#allocation3], 32
    $region41: #{tpu_custom_call.1} parent=1 // pred_fallthru
      _
    %2538 = vsyncpa [#allocation3], 1

</llo_original>
